<compile_context>
chip_gen: v6e
topology: v6e:2x2x1
jax: 0.10.0
libtpu: 0.0.40
codegen_flags: <defaults>
</compile_context>

<pallas_src>
import functools

import numpy as np
import jax
import jax.numpy as jnp
from jax import lax
from jax.experimental import pallas as pl
from jax.experimental.pallas import tpu as pltpu


EPS = 1e-6


def _lse(x, axis):
    # numerically-stable logsumexp, keepdims=True
    m = jnp.max(x, axis=axis, keepdims=True)
    return m + jnp.log(jnp.sum(jnp.exp(x - m), axis=axis, keepdims=True))


def _largest_divisor_at_most(n, cap):
    cap = max(1, min(n, cap))
    for d in range(cap, 0, -1):
        if n % d == 0:
            return d
    return 1


def _sortnet_kernel(seg_ref, qk_ref, wt_ref, u_ref, out_ref, *,
                    heads, temperature, sinkhorn_iter):
    seg = seg_ref[...]            # (SB, NB, T)            bucket indicators
    qk = qk_ref[...]              # (SB, T, H*2*Dh)        heads folded onto lanes
    wt = wt_ref[...]              # (H*MB, H*2*Dh)         block-diag, transposed
    sb, nb, _t = seg.shape
    hmb, _hd2 = wt.shape
    mb = hmb // heads

    # uniform noise already in the kernel's (NB, H, MB, SB) layout (major-dim split only)
    u = u_ref[0].reshape(nb, heads, mb, sb)

    # (1) per-sample segment sums for ALL heads in one batched MXU matmul.
    sqk = jnp.einsum('snt,std->snd', seg, qk,
                     preferred_element_type=jnp.float32)       # (SB, NB, H*2*Dh)

    # (2) per-head projection via the block-diagonal weight, unrolled over the (small,
    #     static) bucket axis so each dot lands directly in the transposed
    #     (features, SB) layout used by the sinkhorn phase -> samples on the lane axis,
    #     no in-kernel transpose needed.
    rows = []
    for n in range(nb):
        rn = lax.dot_general(wt, sqk[:, n, :].astype(wt.dtype),
                             dimension_numbers=(((1,), (1,)), ((), ())),
                             preferred_element_type=jnp.float32)   # (H*MB, SB)
        rn = jnp.maximum(rn, 0.0)                                   # ReLU
        rows.append(jnp.stack([rn[h * mb:(h + 1) * mb] for h in range(heads)]))
    r = jnp.stack(rows)                                             # (NB, H, MB, SB)

    # (3) gumbel_sinkhorn: log, in-kernel gumbel transform (EUP), temperature, sinkhorn.
    g = -jnp.log(-jnp.log(u + EPS) + EPS)
    r = (jnp.log(r + EPS) + g) / temperature
    for _ in range(sinkhorn_iter):            # static trip count (8): fine unrolled
        r = r - _lse(r, axis=2)               # torch dim=2: over max_buckets (MB)
        r = r - _lse(r, axis=0)               # torch dim=1: over buckets (NB)
    out_ref[0] = jnp.exp(r).reshape(nb * heads, mb, sb)


def simple_sort_net_forward(q, k, bucket_size, linear, *, heads,
                            temperature, sinkhorn_iter, noise_key,
                            target_bh_block=128, mxu_dtype=jnp.float32,
                            vmem_budget_bytes=8 << 20):
    """q, k: (BH, T, Dh) float32.  bucket_size: per-sample lists of bucket lengths.
       linear: (1, heads, 2*Dh, MB) parameter.  Returns (out (BH,NB,MB), (seg, u_bh))."""
    bh, t, dh = q.shape
    b = bh // heads
    one, heads_w, dim, mb = linear.shape
    assert one == 1 and heads_w == heads and dim == 2 * dh
    assert len(bucket_size) == b
    nb = len(bucket_size[0])
    assert all(len(bs) == nb and sum(bs) == t for bs in bucket_size)
    hd2 = heads * dim

    # Bucket indicator matrix per sample (NOT replicated per head): (B, NB, T).
    seg_np = np.zeros((b, nb, t), dtype=np.float32)
    for i, sizes in enumerate(bucket_size):
        start = 0
        for j, s in enumerate(sizes):
            seg_np[i, j, start:start + s] = 1.0
            start += s
    seg_f32 = jnp.asarray(seg_np)
    seg = seg_f32.astype(mxu_dtype)

    # concat(q, k) per (sample, head), heads folded onto the feature axis: (B, T, H*2*Dh).
    qk = jnp.concatenate([q, k], axis=-1)                              # (BH, T, 2*Dh)
    qk = qk.reshape(b, heads, t, dim).transpose(0, 2, 1, 3).reshape(b, t, hd2)
    qk = qk.astype(mxu_dtype)

    # Block-diagonal, transposed per-head weights: (H*MB, H*2*Dh).
    w = linear[0]                                                      # (H, 2*Dh, MB)
    eye = jnp.eye(heads, dtype=w.dtype)
    w_bdT = jnp.einsum('hk,hdm->hmkd', eye, w).reshape(heads * mb, hd2).astype(mxu_dtype)

    # Samples per grid step: amortize per-step overhead, but respect a VMEM budget and
    # keep >= 2 grid steps (v7x megacore / pipeline overlap) when possible.
    isz = jnp.dtype(mxu_dtype).itemsize
    per_sample = (nb * t + t * hd2) * isz + 2 * heads * nb * mb * 4
    cap = max(1, target_bh_block // heads)
    cap = min(cap, max(1, int(vmem_budget_bytes // (2 * per_sample))))
    if b >= 2:
        cap = min(cap, b // 2)
    sb = _largest_divisor_at_most(b, cap)
    nblk = b // sb

    # Uniform noise drawn directly in the kernel's (blk, NB*H, MB, SB) layout; the
    # Gumbel transform happens inside the kernel.
    u = jax.random.uniform(noise_key, (nblk, nb * heads, mb, sb),
                           dtype=jnp.float32, minval=0.0, maxval=1.0)

    blk_bytes = (sb * nb * t + sb * t * hd2) * isz \
        + 2 * nb * heads * mb * sb * 4 + heads * mb * hd2 * isz
    vmem_limit = int(min(max(4 * blk_bytes + (2 << 20), 4 << 20), 48 << 20))

    kernel = functools.partial(_sortnet_kernel, heads=heads,
                               temperature=temperature,
                               sinkhorn_iter=sinkhorn_iter)

    out4 = pl.pallas_call(
        kernel,
        out_shape=jax.ShapeDtypeStruct((nblk, nb * heads, mb, sb), jnp.float32),
        grid=(nblk,),
        in_specs=[
            pl.BlockSpec((sb, nb, t), lambda i: (i, 0, 0)),            # seg
            pl.BlockSpec((sb, t, hd2), lambda i: (i, 0, 0)),           # concat(q,k), heads folded
            pl.BlockSpec((heads * mb, hd2), lambda i: (0, 0)),         # block-diag W^T (resident)
            pl.BlockSpec((1, nb * heads, mb, sb), lambda i: (i, 0, 0, 0)),   # uniform noise
        ],
        out_specs=pl.BlockSpec((1, nb * heads, mb, sb), lambda i: (i, 0, 0, 0)),
        compiler_params=pltpu.CompilerParams(
            dimension_semantics=("parallel",),
            vmem_limit_bytes=vmem_limit),
    )(seg, qk, w_bdT, u)

    # Wrapper-side layout plumbing back to the module's (BH, NB, MB) output.
    out = out4.reshape(nblk, nb, heads, mb, sb).transpose(0, 4, 2, 1, 3).reshape(bh, nb, mb)
    u_bh = u.reshape(nblk, nb, heads, mb, sb).transpose(0, 4, 2, 1, 3).reshape(bh, nb, mb)
    return out, (seg_f32, u_bh)


def _reference(q, k, seg_b, linear, u_bh, *, heads, temperature, sinkhorn_iter):
    """Pure-JAX mirror of the PyTorch forward (gumbel_sinkhorn branch)."""
    bh = q.shape[0]
    b = bh // heads
    _, _, dim, mb = linear.shape
    seg = jnp.repeat(seg_b, heads, axis=0)                             # (BH, NB, T)
    W = jnp.broadcast_to(linear, (b, heads, dim, mb)).reshape(bh, dim, mb)
    sq = jnp.einsum('bnt,btd->bnd', seg, q)
    sk = jnp.einsum('bnt,btd->bnd', seg, k)
    x = jnp.concatenate([sq, sk], axis=-1)
    R = jax.nn.relu(jnp.einsum('bnd,bdm->bnm', x, W))
    g = -jnp.log(-jnp.log(u_bh + EPS) + EPS)
    r = (jnp.log(R + EPS) + g) / temperature
    for _ in range(sinkhorn_iter):
        r = r - jax.scipy.special.logsumexp(r, axis=2, keepdims=True)
        r = r - jax.scipy.special.logsumexp(r, axis=1, keepdims=True)
    return jnp.exp(r)


if __name__ == "__main__":
    # Module hyper-params (non_permutative=False -> gumbel_sinkhorn branch).
    heads = 2
    b = 2
    t = 16
    dh = 16                       # per-head feature dim of q/k
    max_buckets = 4
    temperature = 0.7
    sinkhorn_iter = 8
    bucket_size = [[4, 4, 8], [8, 2, 6]]   # per-sample variable-length buckets
    bh = b * heads

    key = jax.random.PRNGKey(0)
    kq, kk, kw, kn = jax.random.split(key, 4)
    q = jax.random.normal(kq, (bh, t, dh), dtype=jnp.float32)
    k = jax.random.normal(kk, (bh, t, dh), dtype=jnp.float32)
    # nn.Parameter(torch.randn(1, heads, dim, max_buckets)), dim = 2*dh
    linear = jax.random.normal(kw, (1, heads, 2 * dh, max_buckets), dtype=jnp.float32)

    out, (seg, u_bh) = simple_sort_net_forward(
        q, k, bucket_size, linear, heads=heads,
        temperature=temperature, sinkhorn_iter=sinkhorn_iter, noise_key=kn)
    out = jax.block_until_ready(out)

    ref = _reference(q, k, seg, linear, u_bh, heads=heads,
                     temperature=temperature, sinkhorn_iter=sinkhorn_iter)
    np.testing.assert_allclose(np.asarray(out), np.asarray(ref),
                               rtol=1e-5, atol=1e-5)
    print("KERNEL_OK")
</pallas_src>

<mosaic_0001>
module attributes {stable_mosaic.version = 11 : i64} {
  func.func @_sortnet_kernel(%arg0: i32, %arg1: memref<1x3x16xf32, #tpu.memory_space<vmem>>, %arg2: memref<1x16x64xf32, #tpu.memory_space<vmem>>, %arg3: memref<8x64xf32, #tpu.memory_space<vmem>>, %arg4: memref<1x6x4x1xf32, #tpu.memory_space<vmem>>, %arg5: memref<1x6x4x1xf32, #tpu.memory_space<vmem>>) attributes {dimension_semantics = [#tpu.dimension_semantics<parallel>], iteration_bounds = array<i64: 2>, scalar_prefetch = 0 : i64, scratch_operands = 0 : i64, tpu.core_type = #tpu.core_type<tc>, window_params = [{transform_indices = @transform_0, window_bounds = array<i64: 1, 3, 16>}, {transform_indices = @transform_1, window_bounds = array<i64: 1, 16, 64>}, {pipeline_mode = #tpu.pipeline_mode<synchronous>, transform_indices = @transform_2, window_bounds = array<i64: 8, 64>}, {transform_indices = @transform_3, window_bounds = array<i64: 1, 6, 4, 1>}, {transform_indices = @transform_4, window_bounds = array<i64: 1, 6, 4, 1>}]} {
    %c0 = arith.constant 0 : index
    %c0_0 = arith.constant 0 : index
    %c0_1 = arith.constant 0 : index
    %0 = vector.load %arg1[%c0, %c0_0, %c0_1] : memref<1x3x16xf32, #tpu.memory_space<vmem>>, vector<1x3x16xf32>
    %c0_2 = arith.constant 0 : index
    %c0_3 = arith.constant 0 : index
    %c0_4 = arith.constant 0 : index
    %1 = vector.load %arg2[%c0_2, %c0_3, %c0_4] : memref<1x16x64xf32, #tpu.memory_space<vmem>>, vector<1x16x64xf32>
    %c0_5 = arith.constant 0 : index
    %c0_6 = arith.constant 0 : index
    %2 = vector.load %arg3[%c0_5, %c0_6] : memref<8x64xf32, #tpu.memory_space<vmem>>, vector<8x64xf32>
    %c0_7 = arith.constant 0 : index
    %c0_8 = arith.constant 0 : index
    %c0_9 = arith.constant 0 : index
    %c0_10 = arith.constant 0 : index
    %3 = vector.load %arg4[%c0_7, %c0_8, %c0_9, %c0_10] : memref<1x6x4x1xf32, #tpu.memory_space<vmem>>, vector<1x6x4x1xf32>
    %4 = vector.shape_cast %3 : vector<1x6x4x1xf32> to vector<6x4x1xf32>
    %5 = vector.shape_cast %4 : vector<6x4x1xf32> to vector<3x2x4x1xf32>
    "tpu.trace_start"() <{level = 10 : i32, message = "snt,std->snd"}> : () -> ()
    %cst = arith.constant dense<0.000000e+00> : vector<1x3x64xf32>
    %6 = tpu.matmul %0, %1, %cst {dimension_numbers = #tpu.dot_dimension_numbers<[2], [1], [1], [2], [0, 0, 0, 1, 1, 2], [0], [0]>} : vector<1x3x16xf32>, vector<1x16x64xf32>, vector<1x3x64xf32> -> vector<1x3x64xf32>
    "tpu.trace_stop"() : () -> ()
    %7 = vector.extract_strided_slice %6 {offsets = [0, 0, 0], sizes = [1, 1, 64], strides = [1, 1, 1]} : vector<1x3x64xf32> to vector<1x1x64xf32>
    %8 = vector.shape_cast %7 : vector<1x1x64xf32> to vector<1x64xf32>
    %cst_11 = arith.constant dense<0.000000e+00> : vector<8x1xf32>
    %9 = tpu.matmul %2, %8, %cst_11 {dimension_numbers = #tpu.dot_dimension_numbers<[1], [1], [0], [0], [0, 0, 1, 0], [], []>} : vector<8x64xf32>, vector<1x64xf32>, vector<8x1xf32> -> vector<8x1xf32>
    %cst_12 = arith.constant 0.000000e+00 : f32
    %10 = vector.broadcast %cst_12 : f32 to vector<8x1xf32>
    %11 = arith.maximumf %9, %10 : vector<8x1xf32>
    %12 = vector.extract_strided_slice %11 {offsets = [0, 0], sizes = [4, 1], strides = [1, 1]} : vector<8x1xf32> to vector<4x1xf32>
    %13 = vector.extract_strided_slice %11 {offsets = [4, 0], sizes = [4, 1], strides = [1, 1]} : vector<8x1xf32> to vector<4x1xf32>
    %14 = vector.shape_cast %12 : vector<4x1xf32> to vector<1x4x1xf32>
    %15 = vector.shape_cast %13 : vector<4x1xf32> to vector<1x4x1xf32>
    %16 = tpu.concatenate %14, %15 in 0 : vector<1x4x1xf32>, vector<1x4x1xf32> -> vector<2x4x1xf32>
    %17 = vector.extract_strided_slice %6 {offsets = [0, 1, 0], sizes = [1, 1, 64], strides = [1, 1, 1]} : vector<1x3x64xf32> to vector<1x1x64xf32>
    %18 = vector.shape_cast %17 : vector<1x1x64xf32> to vector<1x64xf32>
    %cst_13 = arith.constant dense<0.000000e+00> : vector<8x1xf32>
    %19 = tpu.matmul %2, %18, %cst_13 {dimension_numbers = #tpu.dot_dimension_numbers<[1], [1], [0], [0], [0, 0, 1, 0], [], []>} : vector<8x64xf32>, vector<1x64xf32>, vector<8x1xf32> -> vector<8x1xf32>
    %cst_14 = arith.constant 0.000000e+00 : f32
    %20 = vector.broadcast %cst_14 : f32 to vector<8x1xf32>
    %21 = arith.maximumf %19, %20 : vector<8x1xf32>
    %22 = vector.extract_strided_slice %21 {offsets = [0, 0], sizes = [4, 1], strides = [1, 1]} : vector<8x1xf32> to vector<4x1xf32>
    %23 = vector.extract_strided_slice %21 {offsets = [4, 0], sizes = [4, 1], strides = [1, 1]} : vector<8x1xf32> to vector<4x1xf32>
    %24 = vector.shape_cast %22 : vector<4x1xf32> to vector<1x4x1xf32>
    %25 = vector.shape_cast %23 : vector<4x1xf32> to vector<1x4x1xf32>
    %26 = tpu.concatenate %24, %25 in 0 : vector<1x4x1xf32>, vector<1x4x1xf32> -> vector<2x4x1xf32>
    %27 = vector.extract_strided_slice %6 {offsets = [0, 2, 0], sizes = [1, 1, 64], strides = [1, 1, 1]} : vector<1x3x64xf32> to vector<1x1x64xf32>
    %28 = vector.shape_cast %27 : vector<1x1x64xf32> to vector<1x64xf32>
    %cst_15 = arith.constant dense<0.000000e+00> : vector<8x1xf32>
    %29 = tpu.matmul %2, %28, %cst_15 {dimension_numbers = #tpu.dot_dimension_numbers<[1], [1], [0], [0], [0, 0, 1, 0], [], []>} : vector<8x64xf32>, vector<1x64xf32>, vector<8x1xf32> -> vector<8x1xf32>
    %cst_16 = arith.constant 0.000000e+00 : f32
    %30 = vector.broadcast %cst_16 : f32 to vector<8x1xf32>
    %31 = arith.maximumf %29, %30 : vector<8x1xf32>
    %32 = vector.extract_strided_slice %31 {offsets = [0, 0], sizes = [4, 1], strides = [1, 1]} : vector<8x1xf32> to vector<4x1xf32>
    %33 = vector.extract_strided_slice %31 {offsets = [4, 0], sizes = [4, 1], strides = [1, 1]} : vector<8x1xf32> to vector<4x1xf32>
    %34 = vector.shape_cast %32 : vector<4x1xf32> to vector<1x4x1xf32>
    %35 = vector.shape_cast %33 : vector<4x1xf32> to vector<1x4x1xf32>
    %36 = tpu.concatenate %34, %35 in 0 : vector<1x4x1xf32>, vector<1x4x1xf32> -> vector<2x4x1xf32>
    %37 = vector.shape_cast %16 : vector<2x4x1xf32> to vector<1x2x4x1xf32>
    %38 = vector.shape_cast %26 : vector<2x4x1xf32> to vector<1x2x4x1xf32>
    %39 = vector.shape_cast %36 : vector<2x4x1xf32> to vector<1x2x4x1xf32>
    %40 = tpu.concatenate %37, %38, %39 in 0 : vector<1x2x4x1xf32>, vector<1x2x4x1xf32>, vector<1x2x4x1xf32> -> vector<3x2x4x1xf32>
    %cst_17 = arith.constant 9.99999997E-7 : f32
    %41 = vector.broadcast %cst_17 : f32 to vector<3x2x4x1xf32>
    %42 = arith.addf %5, %41 : vector<3x2x4x1xf32>
    %43 = math.log %42 : vector<3x2x4x1xf32>
    %cst_18 = arith.constant 0.000000e+00 : f32
    %44 = vector.broadcast %cst_18 : f32 to vector<3x2x4x1xf32>
    %45 = arith.subf %44, %43 : vector<3x2x4x1xf32>
    %cst_19 = arith.constant 9.99999997E-7 : f32
    %46 = vector.broadcast %cst_19 : f32 to vector<3x2x4x1xf32>
    %47 = arith.addf %45, %46 : vector<3x2x4x1xf32>
    %48 = math.log %47 : vector<3x2x4x1xf32>
    %cst_20 = arith.constant 0.000000e+00 : f32
    %49 = vector.broadcast %cst_20 : f32 to vector<3x2x4x1xf32>
    %50 = arith.subf %49, %48 : vector<3x2x4x1xf32>
    %cst_21 = arith.constant 9.99999997E-7 : f32
    %51 = vector.broadcast %cst_21 : f32 to vector<3x2x4x1xf32>
    %52 = arith.addf %40, %51 : vector<3x2x4x1xf32>
    %53 = math.log %52 : vector<3x2x4x1xf32>
    %54 = arith.addf %53, %50 : vector<3x2x4x1xf32>
    %cst_22 = arith.constant 0.699999988 : f32
    %55 = vector.broadcast %cst_22 : f32 to vector<3x2x4x1xf32>
    %56 = arith.divf %54, %55 : vector<3x2x4x1xf32>
    %cst_23 = arith.constant dense<0xFF800000> : vector<3x2x1xf32>
    %57 = vector.multi_reduction <maximumf>, %56, %cst_23 [2] : vector<3x2x4x1xf32> to vector<3x2x1xf32>
    %58 = vector.shape_cast %57 : vector<3x2x1xf32> to vector<3x2x1x1xf32>
    %59 = vector.broadcast %58 : vector<3x2x1x1xf32> to vector<3x2x4x1xf32>
    %60 = arith.subf %56, %59 : vector<3x2x4x1xf32>
    %61 = math.exp %60 : vector<3x2x4x1xf32>
    %cst_24 = arith.constant dense<0.000000e+00> : vector<3x2x1xf32>
    %62 = vector.multi_reduction <add>, %61, %cst_24 [2] : vector<3x2x4x1xf32> to vector<3x2x1xf32>
    %63 = vector.shape_cast %62 : vector<3x2x1xf32> to vector<3x2x1x1xf32>
    %64 = math.log %63 : vector<3x2x1x1xf32>
    %65 = arith.addf %58, %64 : vector<3x2x1x1xf32>
    %66 = vector.broadcast %65 : vector<3x2x1x1xf32> to vector<3x2x4x1xf32>
    %67 = arith.subf %56, %66 : vector<3x2x4x1xf32>
    %cst_25 = arith.constant dense<0xFF800000> : vector<2x4x1xf32>
    %68 = vector.multi_reduction <maximumf>, %67, %cst_25 [0] : vector<3x2x4x1xf32> to vector<2x4x1xf32>
    %69 = vector.shape_cast %68 : vector<2x4x1xf32> to vector<1x2x4x1xf32>
    %70 = vector.broadcast %69 : vector<1x2x4x1xf32> to vector<3x2x4x1xf32>
    %71 = arith.subf %67, %70 : vector<3x2x4x1xf32>
    %72 = math.exp %71 : vector<3x2x4x1xf32>
    %cst_26 = arith.constant dense<0.000000e+00> : vector<2x4x1xf32>
    %73 = vector.multi_reduction <add>, %72, %cst_26 [0] : vector<3x2x4x1xf32> to vector<2x4x1xf32>
    %74 = vector.shape_cast %73 : vector<2x4x1xf32> to vector<1x2x4x1xf32>
    %75 = math.log %74 : vector<1x2x4x1xf32>
    %76 = arith.addf %69, %75 : vector<1x2x4x1xf32>
    %77 = vector.broadcast %76 : vector<1x2x4x1xf32> to vector<3x2x4x1xf32>
    %78 = arith.subf %67, %77 : vector<3x2x4x1xf32>
    %cst_27 = arith.constant dense<0xFF800000> : vector<3x2x1xf32>
    %79 = vector.multi_reduction <maximumf>, %78, %cst_27 [2] : vector<3x2x4x1xf32> to vector<3x2x1xf32>
    %80 = vector.shape_cast %79 : vector<3x2x1xf32> to vector<3x2x1x1xf32>
    %81 = vector.broadcast %80 : vector<3x2x1x1xf32> to vector<3x2x4x1xf32>
    %82 = arith.subf %78, %81 : vector<3x2x4x1xf32>
    %83 = math.exp %82 : vector<3x2x4x1xf32>
    %cst_28 = arith.constant dense<0.000000e+00> : vector<3x2x1xf32>
    %84 = vector.multi_reduction <add>, %83, %cst_28 [2] : vector<3x2x4x1xf32> to vector<3x2x1xf32>
    %85 = vector.shape_cast %84 : vector<3x2x1xf32> to vector<3x2x1x1xf32>
    %86 = math.log %85 : vector<3x2x1x1xf32>
    %87 = arith.addf %80, %86 : vector<3x2x1x1xf32>
    %88 = vector.broadcast %87 : vector<3x2x1x1xf32> to vector<3x2x4x1xf32>
    %89 = arith.subf %78, %88 : vector<3x2x4x1xf32>
    %cst_29 = arith.constant dense<0xFF800000> : vector<2x4x1xf32>
    %90 = vector.multi_reduction <maximumf>, %89, %cst_29 [0] : vector<3x2x4x1xf32> to vector<2x4x1xf32>
    %91 = vector.shape_cast %90 : vector<2x4x1xf32> to vector<1x2x4x1xf32>
    %92 = vector.broadcast %91 : vector<1x2x4x1xf32> to vector<3x2x4x1xf32>
    %93 = arith.subf %89, %92 : vector<3x2x4x1xf32>
    %94 = math.exp %93 : vector<3x2x4x1xf32>
    %cst_30 = arith.constant dense<0.000000e+00> : vector<2x4x1xf32>
    %95 = vector.multi_reduction <add>, %94, %cst_30 [0] : vector<3x2x4x1xf32> to vector<2x4x1xf32>
    %96 = vector.shape_cast %95 : vector<2x4x1xf32> to vector<1x2x4x1xf32>
    %97 = math.log %96 : vector<1x2x4x1xf32>
    %98 = arith.addf %91, %97 : vector<1x2x4x1xf32>
    %99 = vector.broadcast %98 : vector<1x2x4x1xf32> to vector<3x2x4x1xf32>
    %100 = arith.subf %89, %99 : vector<3x2x4x1xf32>
    %cst_31 = arith.constant dense<0xFF800000> : vector<3x2x1xf32>
    %101 = vector.multi_reduction <maximumf>, %100, %cst_31 [2] : vector<3x2x4x1xf32> to vector<3x2x1xf32>
    %102 = vector.shape_cast %101 : vector<3x2x1xf32> to vector<3x2x1x1xf32>
    %103 = vector.broadcast %102 : vector<3x2x1x1xf32> to vector<3x2x4x1xf32>
    %104 = arith.subf %100, %103 : vector<3x2x4x1xf32>
    %105 = math.exp %104 : vector<3x2x4x1xf32>
    %cst_32 = arith.constant dense<0.000000e+00> : vector<3x2x1xf32>
    %106 = vector.multi_reduction <add>, %105, %cst_32 [2] : vector<3x2x4x1xf32> to vector<3x2x1xf32>
    %107 = vector.shape_cast %106 : vector<3x2x1xf32> to vector<3x2x1x1xf32>
    %108 = math.log %107 : vector<3x2x1x1xf32>
    %109 = arith.addf %102, %108 : vector<3x2x1x1xf32>
    %110 = vector.broadcast %109 : vector<3x2x1x1xf32> to vector<3x2x4x1xf32>
    %111 = arith.subf %100, %110 : vector<3x2x4x1xf32>
    %cst_33 = arith.constant dense<0xFF800000> : vector<2x4x1xf32>
    %112 = vector.multi_reduction <maximumf>, %111, %cst_33 [0] : vector<3x2x4x1xf32> to vector<2x4x1xf32>
    %113 = vector.shape_cast %112 : vector<2x4x1xf32> to vector<1x2x4x1xf32>
    %114 = vector.broadcast %113 : vector<1x2x4x1xf32> to vector<3x2x4x1xf32>
    %115 = arith.subf %111, %114 : vector<3x2x4x1xf32>
    %116 = math.exp %115 : vector<3x2x4x1xf32>
    %cst_34 = arith.constant dense<0.000000e+00> : vector<2x4x1xf32>
    %117 = vector.multi_reduction <add>, %116, %cst_34 [0] : vector<3x2x4x1xf32> to vector<2x4x1xf32>
    %118 = vector.shape_cast %117 : vector<2x4x1xf32> to vector<1x2x4x1xf32>
    %119 = math.log %118 : vector<1x2x4x1xf32>
    %120 = arith.addf %113, %119 : vector<1x2x4x1xf32>
    %121 = vector.broadcast %120 : vector<1x2x4x1xf32> to vector<3x2x4x1xf32>
    %122 = arith.subf %111, %121 : vector<3x2x4x1xf32>
    %cst_35 = arith.constant dense<0xFF800000> : vector<3x2x1xf32>
    %123 = vector.multi_reduction <maximumf>, %122, %cst_35 [2] : vector<3x2x4x1xf32> to vector<3x2x1xf32>
    %124 = vector.shape_cast %123 : vector<3x2x1xf32> to vector<3x2x1x1xf32>
    %125 = vector.broadcast %124 : vector<3x2x1x1xf32> to vector<3x2x4x1xf32>
    %126 = arith.subf %122, %125 : vector<3x2x4x1xf32>
    %127 = math.exp %126 : vector<3x2x4x1xf32>
    %cst_36 = arith.constant dense<0.000000e+00> : vector<3x2x1xf32>
    %128 = vector.multi_reduction <add>, %127, %cst_36 [2] : vector<3x2x4x1xf32> to vector<3x2x1xf32>
    %129 = vector.shape_cast %128 : vector<3x2x1xf32> to vector<3x2x1x1xf32>
    %130 = math.log %129 : vector<3x2x1x1xf32>
    %131 = arith.addf %124, %130 : vector<3x2x1x1xf32>
    %132 = vector.broadcast %131 : vector<3x2x1x1xf32> to vector<3x2x4x1xf32>
    %133 = arith.subf %122, %132 : vector<3x2x4x1xf32>
    %cst_37 = arith.constant dense<0xFF800000> : vector<2x4x1xf32>
    %134 = vector.multi_reduction <maximumf>, %133, %cst_37 [0] : vector<3x2x4x1xf32> to vector<2x4x1xf32>
    %135 = vector.shape_cast %134 : vector<2x4x1xf32> to vector<1x2x4x1xf32>
    %136 = vector.broadcast %135 : vector<1x2x4x1xf32> to vector<3x2x4x1xf32>
    %137 = arith.subf %133, %136 : vector<3x2x4x1xf32>
    %138 = math.exp %137 : vector<3x2x4x1xf32>
    %cst_38 = arith.constant dense<0.000000e+00> : vector<2x4x1xf32>
    %139 = vector.multi_reduction <add>, %138, %cst_38 [0] : vector<3x2x4x1xf32> to vector<2x4x1xf32>
    %140 = vector.shape_cast %139 : vector<2x4x1xf32> to vector<1x2x4x1xf32>
    %141 = math.log %140 : vector<1x2x4x1xf32>
    %142 = arith.addf %135, %141 : vector<1x2x4x1xf32>
    %143 = vector.broadcast %142 : vector<1x2x4x1xf32> to vector<3x2x4x1xf32>
    %144 = arith.subf %133, %143 : vector<3x2x4x1xf32>
    %cst_39 = arith.constant dense<0xFF800000> : vector<3x2x1xf32>
    %145 = vector.multi_reduction <maximumf>, %144, %cst_39 [2] : vector<3x2x4x1xf32> to vector<3x2x1xf32>
    %146 = vector.shape_cast %145 : vector<3x2x1xf32> to vector<3x2x1x1xf32>
    %147 = vector.broadcast %146 : vector<3x2x1x1xf32> to vector<3x2x4x1xf32>
    %148 = arith.subf %144, %147 : vector<3x2x4x1xf32>
    %149 = math.exp %148 : vector<3x2x4x1xf32>
    %cst_40 = arith.constant dense<0.000000e+00> : vector<3x2x1xf32>
    %150 = vector.multi_reduction <add>, %149, %cst_40 [2] : vector<3x2x4x1xf32> to vector<3x2x1xf32>
    %151 = vector.shape_cast %150 : vector<3x2x1xf32> to vector<3x2x1x1xf32>
    %152 = math.log %151 : vector<3x2x1x1xf32>
    %153 = arith.addf %146, %152 : vector<3x2x1x1xf32>
    %154 = vector.broadcast %153 : vector<3x2x1x1xf32> to vector<3x2x4x1xf32>
    %155 = arith.subf %144, %154 : vector<3x2x4x1xf32>
    %cst_41 = arith.constant dense<0xFF800000> : vector<2x4x1xf32>
    %156 = vector.multi_reduction <maximumf>, %155, %cst_41 [0] : vector<3x2x4x1xf32> to vector<2x4x1xf32>
    %157 = vector.shape_cast %156 : vector<2x4x1xf32> to vector<1x2x4x1xf32>
    %158 = vector.broadcast %157 : vector<1x2x4x1xf32> to vector<3x2x4x1xf32>
    %159 = arith.subf %155, %158 : vector<3x2x4x1xf32>
    %160 = math.exp %159 : vector<3x2x4x1xf32>
    %cst_42 = arith.constant dense<0.000000e+00> : vector<2x4x1xf32>
    %161 = vector.multi_reduction <add>, %160, %cst_42 [0] : vector<3x2x4x1xf32> to vector<2x4x1xf32>
    %162 = vector.shape_cast %161 : vector<2x4x1xf32> to vector<1x2x4x1xf32>
    %163 = math.log %162 : vector<1x2x4x1xf32>
    %164 = arith.addf %157, %163 : vector<1x2x4x1xf32>
    %165 = vector.broadcast %164 : vector<1x2x4x1xf32> to vector<3x2x4x1xf32>
    %166 = arith.subf %155, %165 : vector<3x2x4x1xf32>
    %cst_43 = arith.constant dense<0xFF800000> : vector<3x2x1xf32>
    %167 = vector.multi_reduction <maximumf>, %166, %cst_43 [2] : vector<3x2x4x1xf32> to vector<3x2x1xf32>
    %168 = vector.shape_cast %167 : vector<3x2x1xf32> to vector<3x2x1x1xf32>
    %169 = vector.broadcast %168 : vector<3x2x1x1xf32> to vector<3x2x4x1xf32>
    %170 = arith.subf %166, %169 : vector<3x2x4x1xf32>
    %171 = math.exp %170 : vector<3x2x4x1xf32>
    %cst_44 = arith.constant dense<0.000000e+00> : vector<3x2x1xf32>
    %172 = vector.multi_reduction <add>, %171, %cst_44 [2] : vector<3x2x4x1xf32> to vector<3x2x1xf32>
    %173 = vector.shape_cast %172 : vector<3x2x1xf32> to vector<3x2x1x1xf32>
    %174 = math.log %173 : vector<3x2x1x1xf32>
    %175 = arith.addf %168, %174 : vector<3x2x1x1xf32>
    %176 = vector.broadcast %175 : vector<3x2x1x1xf32> to vector<3x2x4x1xf32>
    %177 = arith.subf %166, %176 : vector<3x2x4x1xf32>
    %cst_45 = arith.constant dense<0xFF800000> : vector<2x4x1xf32>
    %178 = vector.multi_reduction <maximumf>, %177, %cst_45 [0] : vector<3x2x4x1xf32> to vector<2x4x1xf32>
    %179 = vector.shape_cast %178 : vector<2x4x1xf32> to vector<1x2x4x1xf32>
    %180 = vector.broadcast %179 : vector<1x2x4x1xf32> to vector<3x2x4x1xf32>
    %181 = arith.subf %177, %180 : vector<3x2x4x1xf32>
    %182 = math.exp %181 : vector<3x2x4x1xf32>
    %cst_46 = arith.constant dense<0.000000e+00> : vector<2x4x1xf32>
    %183 = vector.multi_reduction <add>, %182, %cst_46 [0] : vector<3x2x4x1xf32> to vector<2x4x1xf32>
    %184 = vector.shape_cast %183 : vector<2x4x1xf32> to vector<1x2x4x1xf32>
    %185 = math.log %184 : vector<1x2x4x1xf32>
    %186 = arith.addf %179, %185 : vector<1x2x4x1xf32>
    %187 = vector.broadcast %186 : vector<1x2x4x1xf32> to vector<3x2x4x1xf32>
    %188 = arith.subf %177, %187 : vector<3x2x4x1xf32>
    %cst_47 = arith.constant dense<0xFF800000> : vector<3x2x1xf32>
    %189 = vector.multi_reduction <maximumf>, %188, %cst_47 [2] : vector<3x2x4x1xf32> to vector<3x2x1xf32>
    %190 = vector.shape_cast %189 : vector<3x2x1xf32> to vector<3x2x1x1xf32>
    %191 = vector.broadcast %190 : vector<3x2x1x1xf32> to vector<3x2x4x1xf32>
    %192 = arith.subf %188, %191 : vector<3x2x4x1xf32>
    %193 = math.exp %192 : vector<3x2x4x1xf32>
    %cst_48 = arith.constant dense<0.000000e+00> : vector<3x2x1xf32>
    %194 = vector.multi_reduction <add>, %193, %cst_48 [2] : vector<3x2x4x1xf32> to vector<3x2x1xf32>
    %195 = vector.shape_cast %194 : vector<3x2x1xf32> to vector<3x2x1x1xf32>
    %196 = math.log %195 : vector<3x2x1x1xf32>
    %197 = arith.addf %190, %196 : vector<3x2x1x1xf32>
    %198 = vector.broadcast %197 : vector<3x2x1x1xf32> to vector<3x2x4x1xf32>
    %199 = arith.subf %188, %198 : vector<3x2x4x1xf32>
    %cst_49 = arith.constant dense<0xFF800000> : vector<2x4x1xf32>
    %200 = vector.multi_reduction <maximumf>, %199, %cst_49 [0] : vector<3x2x4x1xf32> to vector<2x4x1xf32>
    %201 = vector.shape_cast %200 : vector<2x4x1xf32> to vector<1x2x4x1xf32>
    %202 = vector.broadcast %201 : vector<1x2x4x1xf32> to vector<3x2x4x1xf32>
    %203 = arith.subf %199, %202 : vector<3x2x4x1xf32>
    %204 = math.exp %203 : vector<3x2x4x1xf32>
    %cst_50 = arith.constant dense<0.000000e+00> : vector<2x4x1xf32>
    %205 = vector.multi_reduction <add>, %204, %cst_50 [0] : vector<3x2x4x1xf32> to vector<2x4x1xf32>
    %206 = vector.shape_cast %205 : vector<2x4x1xf32> to vector<1x2x4x1xf32>
    %207 = math.log %206 : vector<1x2x4x1xf32>
    %208 = arith.addf %201, %207 : vector<1x2x4x1xf32>
    %209 = vector.broadcast %208 : vector<1x2x4x1xf32> to vector<3x2x4x1xf32>
    %210 = arith.subf %199, %209 : vector<3x2x4x1xf32>
    %cst_51 = arith.constant dense<0xFF800000> : vector<3x2x1xf32>
    %211 = vector.multi_reduction <maximumf>, %210, %cst_51 [2] : vector<3x2x4x1xf32> to vector<3x2x1xf32>
    %212 = vector.shape_cast %211 : vector<3x2x1xf32> to vector<3x2x1x1xf32>
    %213 = vector.broadcast %212 : vector<3x2x1x1xf32> to vector<3x2x4x1xf32>
    %214 = arith.subf %210, %213 : vector<3x2x4x1xf32>
    %215 = math.exp %214 : vector<3x2x4x1xf32>
    %cst_52 = arith.constant dense<0.000000e+00> : vector<3x2x1xf32>
    %216 = vector.multi_reduction <add>, %215, %cst_52 [2] : vector<3x2x4x1xf32> to vector<3x2x1xf32>
    %217 = vector.shape_cast %216 : vector<3x2x1xf32> to vector<3x2x1x1xf32>
    %218 = math.log %217 : vector<3x2x1x1xf32>
    %219 = arith.addf %212, %218 : vector<3x2x1x1xf32>
    %220 = vector.broadcast %219 : vector<3x2x1x1xf32> to vector<3x2x4x1xf32>
    %221 = arith.subf %210, %220 : vector<3x2x4x1xf32>
    %cst_53 = arith.constant dense<0xFF800000> : vector<2x4x1xf32>
    %222 = vector.multi_reduction <maximumf>, %221, %cst_53 [0] : vector<3x2x4x1xf32> to vector<2x4x1xf32>
    %223 = vector.shape_cast %222 : vector<2x4x1xf32> to vector<1x2x4x1xf32>
    %224 = vector.broadcast %223 : vector<1x2x4x1xf32> to vector<3x2x4x1xf32>
    %225 = arith.subf %221, %224 : vector<3x2x4x1xf32>
    %226 = math.exp %225 : vector<3x2x4x1xf32>
    %cst_54 = arith.constant dense<0.000000e+00> : vector<2x4x1xf32>
    %227 = vector.multi_reduction <add>, %226, %cst_54 [0] : vector<3x2x4x1xf32> to vector<2x4x1xf32>
    %228 = vector.shape_cast %227 : vector<2x4x1xf32> to vector<1x2x4x1xf32>
    %229 = math.log %228 : vector<1x2x4x1xf32>
    %230 = arith.addf %223, %229 : vector<1x2x4x1xf32>
    %231 = vector.broadcast %230 : vector<1x2x4x1xf32> to vector<3x2x4x1xf32>
    %232 = arith.subf %221, %231 : vector<3x2x4x1xf32>
    %233 = math.exp %232 : vector<3x2x4x1xf32>
    %234 = vector.shape_cast %233 : vector<3x2x4x1xf32> to vector<6x4x1xf32>
    %c0_55 = arith.constant 0 : index
    %c0_56 = arith.constant 0 : index
    %c0_57 = arith.constant 0 : index
    %c0_58 = arith.constant 0 : index
    %235 = vector.load %arg5[%c0_55, %c0_56, %c0_57, %c0_58] : memref<1x6x4x1xf32, #tpu.memory_space<vmem>>, vector<1x6x4x1xf32>
    %236 = vector.shape_cast %235 : vector<1x6x4x1xf32> to vector<6x4x1xf32>
    %237 = vector.shape_cast %234 : vector<6x4x1xf32> to vector<1x6x4x1xf32>
    tpu.vector_store %arg5[%c0_55, %c0_56, %c0_57, %c0_58], %237 {strides = array<i32>} : memref<1x6x4x1xf32, #tpu.memory_space<vmem>>, vector<1x6x4x1xf32>,
    return
  }
  func.func @transform_0(%arg0: i32) -> (i32, i32, i32) {
    %c0_i32 = arith.constant 0 : i32
    %c0_i32_0 = arith.constant 0 : i32
    %c0_i32_1 = arith.constant 0 : i32
    return %arg0, %c0_i32, %c0_i32_0 : i32, i32, i32
  }
  func.func @transform_1(%arg0: i32) -> (i32, i32, i32) {
    %c0_i32 = arith.constant 0 : i32
    %c0_i32_0 = arith.constant 0 : i32
    %c0_i32_1 = arith.constant 0 : i32
    return %arg0, %c0_i32, %c0_i32_0 : i32, i32, i32
  }
  func.func @transform_2(%arg0: i32) -> (i32, i32) {
    %c0_i32 = arith.constant 0 : i32
    %c0_i32_0 = arith.constant 0 : i32
    %c0_i32_1 = arith.constant 0 : i32
    return %c0_i32, %c0_i32_0 : i32, i32
  }
  func.func @transform_3(%arg0: i32) -> (i32, i32, i32, i32) {
    %c0_i32 = arith.constant 0 : i32
    %c0_i32_0 = arith.constant 0 : i32
    %c0_i32_1 = arith.constant 0 : i32
    %c0_i32_2 = arith.constant 0 : i32
    return %arg0, %c0_i32, %c0_i32_0, %c0_i32_1 : i32, i32, i32, i32
  }
  func.func @transform_4(%arg0: i32) -> (i32, i32, i32, i32) {
    %c0_i32 = arith.constant 0 : i32
    %c0_i32_0 = arith.constant 0 : i32
    %c0_i32_1 = arith.constant 0 : i32
    %c0_i32_2 = arith.constant 0 : i32
    return %arg0, %c0_i32, %c0_i32_0, %c0_i32_1 : i32, i32, i32, i32
  }
}

</mosaic_0001>

<llo_original>
// kernel: tpu_custom_call.1
$region0: #{tpu_custom_call.1}
  #allocation0 [shape = 'u32[]', space=smem, size = 0x4, offset = 0x4, fixed_abs, tag = 'smem constant byte address 0x4 - core index']
  #allocation1 [shape = 'u32[144,128]{1,0:T(1,128)}', space=vmem, size = 0x12000, scoped, tag = 'internal scratch']
  %s0 = inlined_call_operand.vmem [shape: f32[2,3,16], index: 0, kind: input, shape index: {}]
  %s1 = inlined_call_operand.vmem [shape: f32[2,16,64], index: 1, kind: input, shape index: {}]
  %s2 = inlined_call_operand.vmem [shape: f32[8,64], index: 2, kind: input, shape index: {}]
  %s3 = inlined_call_operand.vmem [shape: f32[2,6,4,1], index: 3, kind: input, shape index: {}]
  %s4 = inlined_call_operand.vmem [shape: f32[2,6,4,1], index: 4, kind: output, shape index: {}]
  %s5 = sld [smem:[#allocation0]]
  $region49: #{tpu_custom_call.1} parent=0
    _
  %s7 = ssub.s32 1, %s5
  %s8 = scalar_select 0, %s7, %s5
  loop: start=0, step=1, limit=4
  $region2: #{tpu_custom_call.1} parent=0 // loop_pre_header
    _
  $region3: #{tpu_custom_call.1} parent=0 // loop_header
    %s10 = sphi 0, %s14
    %p11 = scmp.ge.s32.totalorder %s10, 4
    %s20 = sphi 0, %s22
    %s23 = sphi 0, %s20
    %s24 = sphi 0, %s23
    %s40 = sphi 0, %s24
    %s46 = sphi 0, %s48
    %s49 = sphi 0, %s46
    %s50 = sphi 0, %s49
    %s66 = sphi 0, %s50
    %s70 = sphi 0, %s70
    %s72 = sphi 0, %s70
    %s73 = sphi 0, %s72
    %s87 = sphi 0, %s73
    %s93 = sphi 0, %s95
    %s96 = sphi 0, %s93
    %s97 = sphi 0, %s96
    %s113 = sphi 0, %s97
    %s119 = sphi 0, %s121
    %s122 = sphi 0, %s119
    %s123 = sphi 0, %s122
    %s139 = sphi 0, %s123
  $region4: #{tpu_custom_call.1} parent=0 // loop_header_branch
    %13 = sbr.rel (%p11) target = $region8
  $region5: #{tpu_custom_call.1} parent=0 // loop_body
    %s15 = ssub.s32 %s10, 1
    %s16 = ssub.s32 %s10, 2
    %s17 = sadd.s32 %s10, 1
    %s18 = ssub.s32 %s10, %s17
    %p19 = scmp.eq.s32.totalorder %s18, 0
    %s21 = sadd.s32 %s20, 1
    %s22 = scalar_select %p19, %s20, %s21
    %p25 = pneg %p19
    %p26 = scmp.eq.s32.totalorder %s10, 1
    %p27 = por %p25, %p26
    %p28 = scmp.ne.s32.totalorder %s20, %s23
    %p29 = scmp.eq.s32.totalorder %s10, 0
    %p30 = por %p28, %p29
    %p31 = scmp.ne.s32.totalorder %s20, %s23
    %p32 = scmp.eq.s32.totalorder %s15, 1
    %p33 = por %p31, %p32
    %p34 = scmp.ne.s32.totalorder %s23, %s24
    %p35 = scmp.eq.s32.totalorder %s15, 0
    %p36 = por %p34, %p35
    %p37 = scmp.ne.s32.totalorder %s23, %s24
    %p38 = scmp.eq.s32.totalorder %s16, 1
    %p39 = por %p37, %p38
    %p41 = scmp.ne.s32.totalorder %s24, %s40
    %p42 = scmp.eq.s32.totalorder %s16, 0
    %p43 = por %p41, %p42
    %s44 = ssub.s32 %s10, %s17
    %p45 = scmp.eq.s32.totalorder %s44, 0
    %s47 = sadd.s32 %s46, 1
    %s48 = scalar_select %p45, %s46, %s47
    %p51 = pneg %p45
    %p52 = scmp.eq.s32.totalorder %s10, 1
    %p53 = por %p51, %p52
    %p54 = scmp.ne.s32.totalorder %s46, %s49
    %p55 = scmp.eq.s32.totalorder %s10, 0
    %p56 = por %p54, %p55
    %p57 = scmp.ne.s32.totalorder %s46, %s49
    %p58 = scmp.eq.s32.totalorder %s15, 1
    %p59 = por %p57, %p58
    %p60 = scmp.ne.s32.totalorder %s49, %s50
    %p61 = scmp.eq.s32.totalorder %s15, 0
    %p62 = por %p60, %p61
    %p63 = scmp.ne.s32.totalorder %s49, %s50
    %p64 = scmp.eq.s32.totalorder %s16, 1
    %p65 = por %p63, %p64
    %p67 = scmp.ne.s32.totalorder %s50, %s66
    %p68 = scmp.eq.s32.totalorder %s16, 0
    %p69 = por %p67, %p68
    %s71 = sadd.s32 %s70, 1
    %p74 = scmp.eq.s32.totalorder %s10, 1
    %p75 = scmp.ne.s32.totalorder %s70, %s72
    %p76 = scmp.eq.s32.totalorder %s10, 0
    %p77 = por %p75, %p76
    %p78 = scmp.ne.s32.totalorder %s70, %s72
    %p79 = scmp.eq.s32.totalorder %s15, 1
    %p80 = por %p78, %p79
    %p81 = scmp.ne.s32.totalorder %s72, %s73
    %p82 = scmp.eq.s32.totalorder %s15, 0
    %p83 = por %p81, %p82
    %p84 = scmp.ne.s32.totalorder %s72, %s73
    %p85 = scmp.eq.s32.totalorder %s16, 1
    %p86 = por %p84, %p85
    %p88 = scmp.ne.s32.totalorder %s73, %s87
    %p89 = scmp.eq.s32.totalorder %s16, 0
    %p90 = por %p88, %p89
    %s91 = ssub.s32 %s10, %s17
    %p92 = scmp.eq.s32.totalorder %s91, 0
    %s94 = sadd.s32 %s93, 1
    %s95 = scalar_select %p92, %s93, %s94
    %p98 = pneg %p92
    %p99 = scmp.eq.s32.totalorder %s10, 1
    %p100 = por %p98, %p99
    %p101 = scmp.ne.s32.totalorder %s93, %s96
    %p102 = scmp.eq.s32.totalorder %s10, 0
    %p103 = por %p101, %p102
    %p104 = scmp.ne.s32.totalorder %s93, %s96
    %p105 = scmp.eq.s32.totalorder %s15, 1
    %p106 = por %p104, %p105
    %p107 = scmp.ne.s32.totalorder %s96, %s97
    %p108 = scmp.eq.s32.totalorder %s15, 0
    %p109 = por %p107, %p108
    %p110 = scmp.ne.s32.totalorder %s96, %s97
    %p111 = scmp.eq.s32.totalorder %s16, 1
    %p112 = por %p110, %p111
    %p114 = scmp.ne.s32.totalorder %s97, %s113
    %p115 = scmp.eq.s32.totalorder %s16, 0
    %p116 = por %p114, %p115
    %s117 = ssub.s32 %s10, %s17
    %p118 = scmp.eq.s32.totalorder %s117, 0
    %s120 = sadd.s32 %s119, 1
    %s121 = scalar_select %p118, %s119, %s120
    %p124 = pneg %p118
    %p125 = scmp.eq.s32.totalorder %s10, 1
    %p126 = por %p124, %p125
    %p127 = scmp.ne.s32.totalorder %s119, %s122
    %p128 = scmp.eq.s32.totalorder %s10, 0
    %p129 = por %p127, %p128
    %p130 = scmp.ne.s32.totalorder %s119, %s122
    %p131 = scmp.eq.s32.totalorder %s15, 1
    %p132 = por %p130, %p131
    %p133 = scmp.ne.s32.totalorder %s122, %s123
    %p134 = scmp.eq.s32.totalorder %s15, 0
    %p135 = por %p133, %p134
    %p136 = scmp.ne.s32.totalorder %s122, %s123
    %p137 = scmp.eq.s32.totalorder %s16, 1
    %p138 = por %p136, %p137
    %p140 = scmp.ne.s32.totalorder %s123, %s139
    %p141 = scmp.eq.s32.totalorder %s16, 0
    %p142 = por %p140, %p141
    %p143 = scmp.le.s32.totalorder 1, %s10
    %p144 = scmp.lt.s32.totalorder %s10, 3
    %p145 = pnand %p143, %p144
    %p146 = pneg %p145
    // Predicated region
    $region9: #{tpu_custom_call.1} parent=5 // pred_check
      _
    $region10: #{tpu_custom_call.1} parent=5 // pred_check_branch
      %148 = sbr.rel (%p145) target = $region12
    $region11: #{tpu_custom_call.1} parent=5 // pred_region
      %s149 = ssub.s32 %s10, 1
      // Predicated region
      $region13: #{tpu_custom_call.1} parent=11 // pred_check
        %p150 = pneg %p83
      $region14: #{tpu_custom_call.1} parent=11 // pred_check_branch
        %152 = sbr.rel (%p150) target = $region16
      $region15: #{tpu_custom_call.1} parent=11 // pred_region
        _
      $region16: #{tpu_custom_call.1} parent=11 // pred_fallthru
        _
    $region12: #{tpu_custom_call.1} parent=5 // pred_fallthru
      _
    %p153 = scmp.lt.s32.totalorder %s10, 2
    // Predicated region
    $region17: #{tpu_custom_call.1} parent=5 // pred_check
      %p154 = pneg %p153
    $region18: #{tpu_custom_call.1} parent=5 // pred_check_branch
      %156 = sbr.rel (%p154) target = $region20
    $region19: #{tpu_custom_call.1} parent=5 // pred_region
      // Predicated region
      $region21: #{tpu_custom_call.1} parent=19 // pred_check
        %p157 = pneg %p30
      $region22: #{tpu_custom_call.1} parent=19 // pred_check_branch
        %159 = sbr.rel (%p157) target = $region24
      $region23: #{tpu_custom_call.1} parent=19 // pred_region
        %p160 = scmp.lt.s32.totalorder %s10, 1
        %s161 = scalar_select %p160, %s10, 1
        %s162 = smul.addr %s161, 4
        %s163 = scalar_lea.vmem %s0, %s162
      $region24: #{tpu_custom_call.1} parent=19 // pred_fallthru
        _
      // Predicated region
      $region25: #{tpu_custom_call.1} parent=19 // pred_check
        %p164 = pneg %p56
      $region26: #{tpu_custom_call.1} parent=19 // pred_check_branch
        %166 = sbr.rel (%p164) target = $region28
      $region27: #{tpu_custom_call.1} parent=19 // pred_region
        %p167 = scmp.lt.s32.totalorder %s10, 1
        %s168 = scalar_select %p167, %s10, 1
        %s169 = smul.addr %s168, 2
        %s170 = smul.addr %s169, 8
        %s171 = scalar_lea.vmem %s1, %s170
      $region28: #{tpu_custom_call.1} parent=19 // pred_fallthru
        _
      // Predicated region
      $region29: #{tpu_custom_call.1} parent=19 // pred_check
        %p172 = pneg %p103
      $region30: #{tpu_custom_call.1} parent=19 // pred_check_branch
        %174 = sbr.rel (%p172) target = $region32
      $region31: #{tpu_custom_call.1} parent=19 // pred_region
        %p175 = scmp.lt.s32.totalorder %s10, 1
        %s176 = scalar_select %p175, %s10, 1
        %s177 = smul.addr %s176, 6
        %s178 = smul.addr %s177, 4
        %s179 = scalar_lea.vmem %s3, %s178
      $region32: #{tpu_custom_call.1} parent=19 // pred_fallthru
        _
    $region20: #{tpu_custom_call.1} parent=5 // pred_fallthru
      _
    %p180 = scmp.le.s32.totalorder 1, %s10
    %p181 = scmp.lt.s32.totalorder %s10, 3
    %p182 = pnand %p180, %p181
    %p183 = pneg %p182
    // Predicated region
    $region33: #{tpu_custom_call.1} parent=5 // pred_check
      _
    $region34: #{tpu_custom_call.1} parent=5 // pred_check_branch
      %185 = sbr.rel (%p182) target = $region36
    $region35: #{tpu_custom_call.1} parent=5 // pred_region
      %s186 = ssub.s32 %s10, 1
      %p187 = scmp.lt.s32.totalorder %s15, 1
      %s188 = scalar_select %p187, %s15, 1
      %s189 = smul.addr %s188, 4
      %s190 = scalar_lea.vmem %s0, %s189
      %p191 = pneg %p36
      %p192 = pneg %p33
      %p193 = scmp.lt.s32.totalorder %s15, 1
      %s194 = scalar_select %p193, %s15, 1
      %s195 = smul.addr %s194, 2
      %s196 = smul.addr %s195, 8
      %s197 = scalar_lea.vmem %s1, %s196
      %p198 = pneg %p62
      %p199 = pneg %p59
      %p200 = pneg %p83
      %p201 = pneg %p80
      %p202 = scmp.lt.s32.totalorder %s15, 1
      %s203 = scalar_select %p202, %s15, 1
      %s204 = smul.addr %s203, 6
      %s205 = smul.addr %s204, 4
      %s206 = scalar_lea.vmem %s3, %s205
      %p207 = pneg %p109
      %p208 = pneg %p106
      %p209 = pneg %p135
      %p210 = pneg %p132
      %p211 = scmp.lt.s32.totalorder %s15, 1
      %s212 = scalar_select %p211, %s15, 1
      %s213 = smul.addr %s212, 6
      %s214 = smul.addr %s213, 4
      %s215 = scalar_lea.vmem %s4, %s214
      %p216 = scmp.lt.s32.totalorder %s15, 1
      %s217 = scalar_select %p216, %s15, 1
      %s218 = smul.addr %s217, 4
      %s219 = scalar_lea.vmem %s0, %s218
      %p220 = scmp.lt.s32.totalorder %s15, 1
      %s221 = scalar_select %p220, %s15, 1
      %s222 = smul.addr %s221, 2
      %s223 = smul.addr %s222, 8
      %s224 = scalar_lea.vmem %s1, %s223
      %p225 = scmp.lt.s32.totalorder %s15, 1
      %s226 = scalar_select %p225, %s15, 1
      %s227 = smul.addr %s226, 6
      %s228 = smul.addr %s227, 4
      %s229 = scalar_lea.vmem %s3, %s228
      %p230 = scmp.lt.s32.totalorder %s15, 1
      %s231 = scalar_select %p230, %s15, 1
      %s232 = smul.addr %s231, 6
      %s233 = smul.addr %s232, 4
      %s234 = scalar_lea.vmem %s4, %s233
      %v235 = vld [vmem:[%s219] sm:$0x7]
      %v236 = vld [vmem:[%s224] sm:$0xff]
      %v237 = vld [vmem:[%s224 + $0x8] sm:$0xff]
      %v238 = vld [vmem:[%s2] sm:$0xff]
      %v239 = vld [vmem:[%s229] sm:$0xf]
      %v240 = vld [vmem:[%s229 + $0x4] sm:$0xf]
      %v241 = vld [vmem:[%s229 + $0x8] sm:$0xf]
      %v242 = vld [vmem:[%s229 + $0xc] sm:$0xf]
      %v243 = vld [vmem:[%s229 + $0x10] sm:$0xf]
      %v244 = vld [vmem:[%s229 + $0x14] sm:$0xf]
      %vm245 = vcmask 130048
      %v247 = vsel %vm245, %v235, 0
      %249 = vmatprep.subr.mxu0 0.0
      %250 = vmatpush1.msra.mxu0 0.0
      %251 = vmatprep.subr.mxu0 0.0
      %252 = vmatpush1.msra.mxu0 0.0
      %253 = vmatprep.subr.mxu0 0.0
      %254 = vmatpush1.msra.mxu0 0.0
      %255 = vmatprep.subr.mxu0 0.0
      %256 = vmatpush1.msra.mxu0 0.0
      %257 = vmatprep.subr.mxu0 0.0
      %258 = vmatpush1.msra.mxu0 0.0
      %259 = vmatprep.subr.mxu0 0.0
      %260 = vmatpush1.msra.mxu0 0.0
      %261 = vmatprep.subr.mxu0 0.0
      %262 = vmatpush1.msra.mxu0 0.0
      %263 = vmatprep.subr.mxu0 0.0
      %264 = vmatpush1.msra.mxu0 0.0
      %265 = vmatprep.subr.mxu0 0.0
      %266 = vmatpush1.msra.mxu0 0.0
      %267 = vmatprep.subr.mxu0 0.0
      %268 = vmatpush1.msra.mxu0 0.0
      %269 = vmatprep.subr.mxu0 0.0
      %270 = vmatpush1.msra.mxu0 0.0
      %271 = vmatprep.subr.mxu0 0.0
      %272 = vmatpush1.msra.mxu0 0.0
      %273 = vmatprep.subr.mxu0 0.0
      %274 = vmatpush1.msra.mxu0 0.0
      %275 = vmatprep.subr.mxu0 0.0
      %276 = vmatpush1.msra.mxu0 0.0
      %277 = vmatprep.subr.mxu0 0.0
      %278 = vmatpush1.msra.mxu0 %v237
      %279 = vmatprep.subr.mxu0 0.0
      %280 = vmatpush1.msra.mxu0 %v236
      %281 = vmatprep.subr.mxu0 0.0
      %282 = vmatpush2.msra.mxu0 0.0
      %283 = vmatprep.subr.mxu0 0.0
      %284 = vmatpush2.msra.mxu0 0.0
      %285 = vmatprep.subr.mxu0 0.0
      %286 = vmatpush2.msra.mxu0 0.0
      %287 = vmatprep.subr.mxu0 0.0
      %288 = vmatpush2.msra.mxu0 0.0
      %289 = vmatprep.subr.mxu0 0.0
      %290 = vmatpush2.msra.mxu0 0.0
      %291 = vmatprep.subr.mxu0 0.0
      %292 = vmatpush2.msra.mxu0 0.0
      %293 = vmatprep.subr.mxu0 0.0
      %294 = vmatpush2.msra.mxu0 0.0
      %295 = vmatprep.subr.mxu0 0.0
      %296 = vmatpush2.msra.mxu0 0.0
      %297 = vmatprep.subr.mxu0 0.0
      %298 = vmatpush2.msra.mxu0 0.0
      %299 = vmatprep.subr.mxu0 0.0
      %300 = vmatpush2.msra.mxu0 0.0
      %301 = vmatprep.subr.mxu0 0.0
      %302 = vmatpush2.msra.mxu0 0.0
      %303 = vmatprep.subr.mxu0 0.0
      %304 = vmatpush2.msra.mxu0 0.0
      %305 = vmatprep.subr.mxu0 0.0
      %306 = vmatpush2.msra.mxu0 0.0
      %307 = vmatprep.subr.mxu0 0.0
      %308 = vmatpush2.msra.mxu0 0.0
      %309 = vmatprep.subr.mxu0 0.0
      %310 = vmatpush2.msra.mxu0 0.0
      %311 = vmatprep.subr.mxu0 0.0
      %312 = vmatpush2.msra.mxu0 0.0
      %313 = vmatprep.mubr.f32.mxu0 0.0
      %314 = vmatmul.mubr.f32.gmra.mxu0 %v247
      %v315 = vpop.f32.mrf.mxu0
      %v316 = vadd.f32 0.0, %v315
      %v317 = vpop.f32.mrf.mxu0
      %318 = vdwg.mxu0
      %v319 = vlaneseq
      %v320 = vshrl.u32 %v319, 7
      %v321 = vsub.s32 0, %v320
      %v322 = vrot.slane %v316, %v321
      %v323 = vmul.f32 %v238, %v322
      %vm324 = vcmask 523264
      %v325 = vsel %vm324, %v323, 0.0
      %326 = vadd.xlane.f32.xlu0 %v325
      %v327 = vpop.xlane.xlu0 %326
      %v328 = vmax.f32 %v327, 0.0
      %v330 = vrot.slane %v328, 4
      %v332 = vlaneseq
      %v333 = vshrl.u32 %v332, 7
      %v334 = vsub.s32 1, %v333
      %v335 = vrot.slane %v316, %v334
      %v336 = vmul.f32 %v238, %v335
      %v337 = vsel %vm324, %v336, 0.0
      %338 = vadd.xlane.f32.xlu0 %v337
      %v339 = vpop.xlane.xlu0 %338
      %v340 = vmax.f32 %v339, 0.0
      %v342 = vrot.slane %v340, 4
      %v344 = vlaneseq
      %v345 = vshrl.u32 %v344, 7
      %v346 = vsub.s32 2, %v345
      %v347 = vrot.slane %v316, %v346
      %v348 = vmul.f32 %v238, %v347
      %v349 = vsel %vm324, %v348, 0.0
      %350 = vadd.xlane.f32.xlu0 %v349
      %v351 = vpop.xlane.xlu0 %350
      %v352 = vmax.f32 %v351, 0.0
      %v354 = vrot.slane %v352, 4
      %v356 = vadd.f32 %v239, 1e-06
      %v357 = vadd.f32 %v240, 1e-06
      %v358 = vadd.f32 %v241, 1e-06
      %v359 = vadd.f32 %v242, 1e-06
      %v360 = vadd.f32 %v243, 1e-06
      %v361 = vadd.f32 %v244, 1e-06
      %v362 = vlog2.pop %v356
      %v363 = vmul.f32 %v362, 0.6931472
      %v364 = vlog2.pop %v357
      %v365 = vmul.f32 %v364, 0.6931472
      %v366 = vlog2.pop %v358
      %v367 = vmul.f32 %v366, 0.6931472
      %v368 = vlog2.pop %v359
      %v369 = vmul.f32 %v368, 0.6931472
      %v370 = vlog2.pop %v360
      %v371 = vmul.f32 %v370, 0.6931472
      %v372 = vlog2.pop %v361
      %v373 = vmul.f32 %v372, 0.6931472
      %v374 = vsub.f32 0.0, %v363
      %v375 = vsub.f32 0.0, %v365
      %v376 = vsub.f32 0.0, %v367
      %v377 = vsub.f32 0.0, %v369
      %v378 = vsub.f32 0.0, %v371
      %v379 = vsub.f32 0.0, %v373
      %v380 = vadd.f32 %v374, 1e-06
      %v381 = vadd.f32 %v375, 1e-06
      %v382 = vadd.f32 %v376, 1e-06
      %v383 = vadd.f32 %v377, 1e-06
      %v384 = vadd.f32 %v378, 1e-06
      %v385 = vadd.f32 %v379, 1e-06
      %v386 = vlog2.pop %v380
      %v387 = vmul.f32 %v386, 0.6931472
      %v388 = vlog2.pop %v381
      %v389 = vmul.f32 %v388, 0.6931472
      %v390 = vlog2.pop %v382
      %v391 = vmul.f32 %v390, 0.6931472
      %v392 = vlog2.pop %v383
      %v393 = vmul.f32 %v392, 0.6931472
      %v394 = vlog2.pop %v384
      %v395 = vmul.f32 %v394, 0.6931472
      %v396 = vlog2.pop %v385
      %v397 = vmul.f32 %v396, 0.6931472
      %v398 = vsub.f32 0.0, %v387
      %v399 = vsub.f32 0.0, %v389
      %v400 = vsub.f32 0.0, %v391
      %v401 = vsub.f32 0.0, %v393
      %v402 = vsub.f32 0.0, %v395
      %v403 = vsub.f32 0.0, %v397
      %v404 = vadd.f32 %v328, 1e-06
      %v405 = vadd.f32 %v330, 1e-06
      %v406 = vadd.f32 %v340, 1e-06
      %v407 = vadd.f32 %v342, 1e-06
      %v408 = vadd.f32 %v352, 1e-06
      %v409 = vadd.f32 %v354, 1e-06
      %v410 = vlog2.pop %v404
      %v411 = vmul.f32 %v410, 0.6931472
      %v412 = vlog2.pop %v405
      %v413 = vmul.f32 %v412, 0.6931472
      %v414 = vlog2.pop %v406
      %v415 = vmul.f32 %v414, 0.6931472
      %v416 = vlog2.pop %v407
      %v417 = vmul.f32 %v416, 0.6931472
      %v418 = vlog2.pop %v408
      %v419 = vmul.f32 %v418, 0.6931472
      %v420 = vlog2.pop %v409
      %v421 = vmul.f32 %v420, 0.6931472
      %v422 = vadd.f32 %v411, %v398
      %v423 = vadd.f32 %v413, %v399
      %v424 = vadd.f32 %v415, %v400
      %v425 = vadd.f32 %v417, %v401
      %v426 = vadd.f32 %v419, %v402
      %v427 = vadd.f32 %v421, %v403
      %v428 = vrcp.pop 0.7
      %v429 = vmul.f32 %v422, %v428
      %v430 = vmul.f32 %v423, %v428
      %v431 = vmul.f32 %v424, %v428
      %v432 = vmul.f32 %v425, %v428
      %v433 = vmul.f32 %v426, %v428
      %v434 = vmul.f32 %v427, %v428
      %vm435 = vcmask 3072
      %v436 = vsel %vm435, %v429, -inf
      %v437 = vrot.slane %v436, 4
      %v438 = vmax.f32 %v436, %v437
      %v439 = vrot.slane %v438, 2
      %v440 = vmax.f32 %v438, %v439
      %v441 = vrot.slane %v440, 1
      %v442 = vmax.f32 %v440, %v441
      %v443 = vsel %vm435, %v430, -inf
      %v444 = vrot.slane %v443, 4
      %v445 = vmax.f32 %v443, %v444
      %v446 = vrot.slane %v445, 2
      %v447 = vmax.f32 %v445, %v446
      %v448 = vrot.slane %v447, 1
      %v449 = vmax.f32 %v447, %v448
      %v450 = vsel %vm435, %v431, -inf
      %v451 = vrot.slane %v450, 4
      %v452 = vmax.f32 %v450, %v451
      %v453 = vrot.slane %v452, 2
      %v454 = vmax.f32 %v452, %v453
      %v455 = vrot.slane %v454, 1
      %v456 = vmax.f32 %v454, %v455
      %v457 = vsel %vm435, %v432, -inf
      %v458 = vrot.slane %v457, 4
      %v459 = vmax.f32 %v457, %v458
      %v460 = vrot.slane %v459, 2
      %v461 = vmax.f32 %v459, %v460
      %v462 = vrot.slane %v461, 1
      %v463 = vmax.f32 %v461, %v462
      %v464 = vsel %vm435, %v433, -inf
      %v465 = vrot.slane %v464, 4
      %v466 = vmax.f32 %v464, %v465
      %v467 = vrot.slane %v466, 2
      %v468 = vmax.f32 %v466, %v467
      %v469 = vrot.slane %v468, 1
      %v470 = vmax.f32 %v468, %v469
      %v471 = vsel %vm435, %v434, -inf
      %v472 = vrot.slane %v471, 4
      %v473 = vmax.f32 %v471, %v472
      %v474 = vrot.slane %v473, 2
      %v475 = vmax.f32 %v473, %v474
      %v476 = vrot.slane %v475, 1
      %v477 = vmax.f32 %v475, %v476
      %v478 = vsub.f32 %v429, %v442
      %v479 = vsub.f32 %v430, %v449
      %v480 = vsub.f32 %v431, %v456
      %v481 = vsub.f32 %v432, %v463
      %v482 = vsub.f32 %v433, %v470
      %v483 = vsub.f32 %v434, %v477
      %v484 = vmul.f32 %v478, 1.442695
      %v485 = vpow.pop %v484
      %v486 = vmul.f32 %v479, 1.442695
      %v487 = vpow.pop %v486
      %v488 = vmul.f32 %v480, 1.442695
      %v489 = vpow.pop %v488
      %v490 = vmul.f32 %v481, 1.442695
      %v491 = vpow.pop %v490
      %v492 = vmul.f32 %v482, 1.442695
      %v493 = vpow.pop %v492
      %v494 = vmul.f32 %v483, 1.442695
      %v495 = vpow.pop %v494
      %v496 = vsel %vm435, %v485, 0.0
      %v497 = vrot.slane %v496, 4
      %v498 = vadd.f32 %v496, %v497
      %v499 = vrot.slane %v498, 2
      %v500 = vadd.f32 %v498, %v499
      %v501 = vrot.slane %v500, 1
      %v502 = vadd.f32 %v500, %v501
      %v503 = vsel %vm435, %v487, 0.0
      %v504 = vrot.slane %v503, 4
      %v505 = vadd.f32 %v503, %v504
      %v506 = vrot.slane %v505, 2
      %v507 = vadd.f32 %v505, %v506
      %v508 = vrot.slane %v507, 1
      %v509 = vadd.f32 %v507, %v508
      %v510 = vsel %vm435, %v489, 0.0
      %v511 = vrot.slane %v510, 4
      %v512 = vadd.f32 %v510, %v511
      %v513 = vrot.slane %v512, 2
      %v514 = vadd.f32 %v512, %v513
      %v515 = vrot.slane %v514, 1
      %v516 = vadd.f32 %v514, %v515
      %v517 = vsel %vm435, %v491, 0.0
      %v518 = vrot.slane %v517, 4
      %v519 = vadd.f32 %v517, %v518
      %v520 = vrot.slane %v519, 2
      %v521 = vadd.f32 %v519, %v520
      %v522 = vrot.slane %v521, 1
      %v523 = vadd.f32 %v521, %v522
      %v524 = vsel %vm435, %v493, 0.0
      %v525 = vrot.slane %v524, 4
      %v526 = vadd.f32 %v524, %v525
      %v527 = vrot.slane %v526, 2
      %v528 = vadd.f32 %v526, %v527
      %v529 = vrot.slane %v528, 1
      %v530 = vadd.f32 %v528, %v529
      %v531 = vsel %vm435, %v495, 0.0
      %v532 = vrot.slane %v531, 4
      %v533 = vadd.f32 %v531, %v532
      %v534 = vrot.slane %v533, 2
      %v535 = vadd.f32 %v533, %v534
      %v536 = vrot.slane %v535, 1
      %v537 = vadd.f32 %v535, %v536
      %v538 = vlog2.pop %v502
      %v539 = vmul.f32 %v538, 0.6931472
      %v540 = vlog2.pop %v509
      %v541 = vmul.f32 %v540, 0.6931472
      %v542 = vlog2.pop %v516
      %v543 = vmul.f32 %v542, 0.6931472
      %v544 = vlog2.pop %v523
      %v545 = vmul.f32 %v544, 0.6931472
      %v546 = vlog2.pop %v530
      %v547 = vmul.f32 %v546, 0.6931472
      %v548 = vlog2.pop %v537
      %v549 = vmul.f32 %v548, 0.6931472
      %v550 = vadd.f32 %v442, %v539
      %v551 = vadd.f32 %v449, %v541
      %v552 = vadd.f32 %v456, %v543
      %v553 = vadd.f32 %v463, %v545
      %v554 = vadd.f32 %v470, %v547
      %v555 = vadd.f32 %v477, %v549
      %v556 = vsub.f32 %v429, %v550
      %v557 = vsub.f32 %v430, %v551
      %v558 = vsub.f32 %v431, %v552
      %v559 = vsub.f32 %v432, %v553
      %v560 = vsub.f32 %v433, %v554
      %v561 = vsub.f32 %v434, %v555
      %v562 = vsel %vm435, %v556, -inf
      %v563 = vsel %vm435, %v558, -inf
      %v564 = vsel %vm435, %v560, -inf
      %v565 = vmax.f32 %v562, %v564
      %v566 = vmax.f32 %v565, %v563
      %v567 = vsel %vm435, %v557, -inf
      %v568 = vsel %vm435, %v559, -inf
      %v569 = vsel %vm435, %v561, -inf
      %v570 = vmax.f32 %v567, %v569
      %v571 = vmax.f32 %v570, %v568
      %v572 = vsub.f32 %v556, %v566
      %v573 = vsub.f32 %v557, %v571
      %v574 = vsub.f32 %v558, %v566
      %v575 = vsub.f32 %v559, %v571
      %v576 = vsub.f32 %v560, %v566
      %v577 = vsub.f32 %v561, %v571
      %v578 = vmul.f32 %v572, 1.442695
      %v579 = vpow.pop %v578
      %v580 = vmul.f32 %v573, 1.442695
      %v581 = vpow.pop %v580
      %v582 = vmul.f32 %v574, 1.442695
      %v583 = vpow.pop %v582
      %v584 = vmul.f32 %v575, 1.442695
      %v585 = vpow.pop %v584
      %v586 = vmul.f32 %v576, 1.442695
      %v587 = vpow.pop %v586
      %v588 = vmul.f32 %v577, 1.442695
      %v589 = vpow.pop %v588
      %v590 = vsel %vm435, %v579, 0.0
      %v591 = vsel %vm435, %v583, 0.0
      %v592 = vadd.f32 %v590, %v591
      %v593 = vsel %vm435, %v587, 0.0
      %v594 = vadd.f32 %v592, %v593
      %v595 = vsel %vm435, %v581, 0.0
      %v596 = vsel %vm435, %v585, 0.0
      %v597 = vadd.f32 %v595, %v596
      %v598 = vsel %vm435, %v589, 0.0
      %v599 = vadd.f32 %v597, %v598
      %v600 = vlog2.pop %v594
      %v601 = vmul.f32 %v600, 0.6931472
      %v602 = vlog2.pop %v599
      %v603 = vmul.f32 %v602, 0.6931472
      %v604 = vadd.f32 %v566, %v601
      %v605 = vadd.f32 %v571, %v603
      %v606 = vsub.f32 %v556, %v604
      %v607 = vsub.f32 %v557, %v605
      %v608 = vsub.f32 %v558, %v604
      %v609 = vsub.f32 %v559, %v605
      %v610 = vsub.f32 %v560, %v604
      %v611 = vsub.f32 %v561, %v605
      %v612 = vsel %vm435, %v606, -inf
      %v613 = vrot.slane %v612, 4
      %v614 = vmax.f32 %v612, %v613
      %v615 = vrot.slane %v614, 2
      %v616 = vmax.f32 %v614, %v615
      %v617 = vrot.slane %v616, 1
      %v618 = vmax.f32 %v616, %v617
      %v619 = vsel %vm435, %v607, -inf
      %v620 = vrot.slane %v619, 4
      %v621 = vmax.f32 %v619, %v620
      %v622 = vrot.slane %v621, 2
      %v623 = vmax.f32 %v621, %v622
      %v624 = vrot.slane %v623, 1
      %v625 = vmax.f32 %v623, %v624
      %v626 = vsel %vm435, %v608, -inf
      %v627 = vrot.slane %v626, 4
      %v628 = vmax.f32 %v626, %v627
      %v629 = vrot.slane %v628, 2
      %v630 = vmax.f32 %v628, %v629
      %v631 = vrot.slane %v630, 1
      %v632 = vmax.f32 %v630, %v631
      %v633 = vsel %vm435, %v609, -inf
      %v634 = vrot.slane %v633, 4
      %v635 = vmax.f32 %v633, %v634
      %v636 = vrot.slane %v635, 2
      %v637 = vmax.f32 %v635, %v636
      %v638 = vrot.slane %v637, 1
      %v639 = vmax.f32 %v637, %v638
      %v640 = vsel %vm435, %v610, -inf
      %v641 = vrot.slane %v640, 4
      %v642 = vmax.f32 %v640, %v641
      %v643 = vrot.slane %v642, 2
      %v644 = vmax.f32 %v642, %v643
      %v645 = vrot.slane %v644, 1
      %v646 = vmax.f32 %v644, %v645
      %v647 = vsel %vm435, %v611, -inf
      %v648 = vrot.slane %v647, 4
      %v649 = vmax.f32 %v647, %v648
      %v650 = vrot.slane %v649, 2
      %v651 = vmax.f32 %v649, %v650
      %v652 = vrot.slane %v651, 1
      %v653 = vmax.f32 %v651, %v652
      %v654 = vsub.f32 %v606, %v618
      %v655 = vsub.f32 %v607, %v625
      %v656 = vsub.f32 %v608, %v632
      %v657 = vsub.f32 %v609, %v639
      %v658 = vsub.f32 %v610, %v646
      %v659 = vsub.f32 %v611, %v653
      %v660 = vmul.f32 %v654, 1.442695
      %v661 = vpow.pop %v660
      %v662 = vmul.f32 %v655, 1.442695
      %v663 = vpow.pop %v662
      %v664 = vmul.f32 %v656, 1.442695
      %v665 = vpow.pop %v664
      %v666 = vmul.f32 %v657, 1.442695
      %v667 = vpow.pop %v666
      %v668 = vmul.f32 %v658, 1.442695
      %v669 = vpow.pop %v668
      %v670 = vmul.f32 %v659, 1.442695
      %v671 = vpow.pop %v670
      %v672 = vsel %vm435, %v661, 0.0
      %v673 = vrot.slane %v672, 4
      %v674 = vadd.f32 %v672, %v673
      %v675 = vrot.slane %v674, 2
      %v676 = vadd.f32 %v674, %v675
      %v677 = vrot.slane %v676, 1
      %v678 = vadd.f32 %v676, %v677
      %v679 = vsel %vm435, %v663, 0.0
      %v680 = vrot.slane %v679, 4
      %v681 = vadd.f32 %v679, %v680
      %v682 = vrot.slane %v681, 2
      %v683 = vadd.f32 %v681, %v682
      %v684 = vrot.slane %v683, 1
      %v685 = vadd.f32 %v683, %v684
      %v686 = vsel %vm435, %v665, 0.0
      %v687 = vrot.slane %v686, 4
      %v688 = vadd.f32 %v686, %v687
      %v689 = vrot.slane %v688, 2
      %v690 = vadd.f32 %v688, %v689
      %v691 = vrot.slane %v690, 1
      %v692 = vadd.f32 %v690, %v691
      %v693 = vsel %vm435, %v667, 0.0
      %v694 = vrot.slane %v693, 4
      %v695 = vadd.f32 %v693, %v694
      %v696 = vrot.slane %v695, 2
      %v697 = vadd.f32 %v695, %v696
      %v698 = vrot.slane %v697, 1
      %v699 = vadd.f32 %v697, %v698
      %v700 = vsel %vm435, %v669, 0.0
      %v701 = vrot.slane %v700, 4
      %v702 = vadd.f32 %v700, %v701
      %v703 = vrot.slane %v702, 2
      %v704 = vadd.f32 %v702, %v703
      %v705 = vrot.slane %v704, 1
      %v706 = vadd.f32 %v704, %v705
      %v707 = vsel %vm435, %v671, 0.0
      %v708 = vrot.slane %v707, 4
      %v709 = vadd.f32 %v707, %v708
      %v710 = vrot.slane %v709, 2
      %v711 = vadd.f32 %v709, %v710
      %v712 = vrot.slane %v711, 1
      %v713 = vadd.f32 %v711, %v712
      %v714 = vlog2.pop %v678
      %v715 = vmul.f32 %v714, 0.6931472
      %v716 = vlog2.pop %v685
      %v717 = vmul.f32 %v716, 0.6931472
      %v718 = vlog2.pop %v692
      %v719 = vmul.f32 %v718, 0.6931472
      %v720 = vlog2.pop %v699
      %v721 = vmul.f32 %v720, 0.6931472
      %v722 = vlog2.pop %v706
      %v723 = vmul.f32 %v722, 0.6931472
      %v724 = vlog2.pop %v713
      %v725 = vmul.f32 %v724, 0.6931472
      %v726 = vadd.f32 %v618, %v715
      %v727 = vadd.f32 %v625, %v717
      %v728 = vadd.f32 %v632, %v719
      %v729 = vadd.f32 %v639, %v721
      %v730 = vadd.f32 %v646, %v723
      %v731 = vadd.f32 %v653, %v725
      %v732 = vsub.f32 %v606, %v726
      %v733 = vsub.f32 %v607, %v727
      %v734 = vsub.f32 %v608, %v728
      %v735 = vsub.f32 %v609, %v729
      %v736 = vsub.f32 %v610, %v730
      %v737 = vsub.f32 %v611, %v731
      %v738 = vsel %vm435, %v732, -inf
      %v739 = vsel %vm435, %v734, -inf
      %v740 = vsel %vm435, %v736, -inf
      %v741 = vmax.f32 %v738, %v740
      %v742 = vmax.f32 %v741, %v739
      %v743 = vsel %vm435, %v733, -inf
      %v744 = vsel %vm435, %v735, -inf
      %v745 = vsel %vm435, %v737, -inf
      %v746 = vmax.f32 %v743, %v745
      %v747 = vmax.f32 %v746, %v744
      %v748 = vsub.f32 %v732, %v742
      %v749 = vsub.f32 %v733, %v747
      %v750 = vsub.f32 %v734, %v742
      %v751 = vsub.f32 %v735, %v747
      %v752 = vsub.f32 %v736, %v742
      %v753 = vsub.f32 %v737, %v747
      %v754 = vmul.f32 %v748, 1.442695
      %v755 = vpow.pop %v754
      %v756 = vmul.f32 %v749, 1.442695
      %v757 = vpow.pop %v756
      %v758 = vmul.f32 %v750, 1.442695
      %v759 = vpow.pop %v758
      %v760 = vmul.f32 %v751, 1.442695
      %v761 = vpow.pop %v760
      %v762 = vmul.f32 %v752, 1.442695
      %v763 = vpow.pop %v762
      %v764 = vmul.f32 %v753, 1.442695
      %v765 = vpow.pop %v764
      %v766 = vsel %vm435, %v755, 0.0
      %v767 = vsel %vm435, %v759, 0.0
      %v768 = vadd.f32 %v766, %v767
      %v769 = vsel %vm435, %v763, 0.0
      %v770 = vadd.f32 %v768, %v769
      %v771 = vsel %vm435, %v757, 0.0
      %v772 = vsel %vm435, %v761, 0.0
      %v773 = vadd.f32 %v771, %v772
      %v774 = vsel %vm435, %v765, 0.0
      %v775 = vadd.f32 %v773, %v774
      %v776 = vlog2.pop %v770
      %v777 = vmul.f32 %v776, 0.6931472
      %v778 = vlog2.pop %v775
      %v779 = vmul.f32 %v778, 0.6931472
      %v780 = vadd.f32 %v742, %v777
      %v781 = vadd.f32 %v747, %v779
      %v782 = vsub.f32 %v732, %v780
      %v783 = vsub.f32 %v733, %v781
      %v784 = vsub.f32 %v734, %v780
      %v785 = vsub.f32 %v735, %v781
      %v786 = vsub.f32 %v736, %v780
      %v787 = vsub.f32 %v737, %v781
      %v788 = vsel %vm435, %v782, -inf
      %v789 = vrot.slane %v788, 4
      %v790 = vmax.f32 %v788, %v789
      %v791 = vrot.slane %v790, 2
      %v792 = vmax.f32 %v790, %v791
      %v793 = vrot.slane %v792, 1
      %v794 = vmax.f32 %v792, %v793
      %v795 = vsel %vm435, %v783, -inf
      %v796 = vrot.slane %v795, 4
      %v797 = vmax.f32 %v795, %v796
      %v798 = vrot.slane %v797, 2
      %v799 = vmax.f32 %v797, %v798
      %v800 = vrot.slane %v799, 1
      %v801 = vmax.f32 %v799, %v800
      %v802 = vsel %vm435, %v784, -inf
      %v803 = vrot.slane %v802, 4
      %v804 = vmax.f32 %v802, %v803
      %v805 = vrot.slane %v804, 2
      %v806 = vmax.f32 %v804, %v805
      %v807 = vrot.slane %v806, 1
      %v808 = vmax.f32 %v806, %v807
      %v809 = vsel %vm435, %v785, -inf
      %v810 = vrot.slane %v809, 4
      %v811 = vmax.f32 %v809, %v810
      %v812 = vrot.slane %v811, 2
      %v813 = vmax.f32 %v811, %v812
      %v814 = vrot.slane %v813, 1
      %v815 = vmax.f32 %v813, %v814
      %v816 = vsel %vm435, %v786, -inf
      %v817 = vrot.slane %v816, 4
      %v818 = vmax.f32 %v816, %v817
      %v819 = vrot.slane %v818, 2
      %v820 = vmax.f32 %v818, %v819
      %v821 = vrot.slane %v820, 1
      %v822 = vmax.f32 %v820, %v821
      %v823 = vsel %vm435, %v787, -inf
      %v824 = vrot.slane %v823, 4
      %v825 = vmax.f32 %v823, %v824
      %v826 = vrot.slane %v825, 2
      %v827 = vmax.f32 %v825, %v826
      %v828 = vrot.slane %v827, 1
      %v829 = vmax.f32 %v827, %v828
      %v830 = vsub.f32 %v782, %v794
      %v831 = vsub.f32 %v783, %v801
      %v832 = vsub.f32 %v784, %v808
      %v833 = vsub.f32 %v785, %v815
      %v834 = vsub.f32 %v786, %v822
      %v835 = vsub.f32 %v787, %v829
      %v836 = vmul.f32 %v830, 1.442695
      %v837 = vpow.pop %v836
      %v838 = vmul.f32 %v831, 1.442695
      %v839 = vpow.pop %v838
      %v840 = vmul.f32 %v832, 1.442695
      %v841 = vpow.pop %v840
      %v842 = vmul.f32 %v833, 1.442695
      %v843 = vpow.pop %v842
      %v844 = vmul.f32 %v834, 1.442695
      %v845 = vpow.pop %v844
      %v846 = vmul.f32 %v835, 1.442695
      %v847 = vpow.pop %v846
      %v848 = vsel %vm435, %v837, 0.0
      %v849 = vrot.slane %v848, 4
      %v850 = vadd.f32 %v848, %v849
      %v851 = vrot.slane %v850, 2
      %v852 = vadd.f32 %v850, %v851
      %v853 = vrot.slane %v852, 1
      %v854 = vadd.f32 %v852, %v853
      %v855 = vsel %vm435, %v839, 0.0
      %v856 = vrot.slane %v855, 4
      %v857 = vadd.f32 %v855, %v856
      %v858 = vrot.slane %v857, 2
      %v859 = vadd.f32 %v857, %v858
      %v860 = vrot.slane %v859, 1
      %v861 = vadd.f32 %v859, %v860
      %v862 = vsel %vm435, %v841, 0.0
      %v863 = vrot.slane %v862, 4
      %v864 = vadd.f32 %v862, %v863
      %v865 = vrot.slane %v864, 2
      %v866 = vadd.f32 %v864, %v865
      %v867 = vrot.slane %v866, 1
      %v868 = vadd.f32 %v866, %v867
      %v869 = vsel %vm435, %v843, 0.0
      %v870 = vrot.slane %v869, 4
      %v871 = vadd.f32 %v869, %v870
      %v872 = vrot.slane %v871, 2
      %v873 = vadd.f32 %v871, %v872
      %v874 = vrot.slane %v873, 1
      %v875 = vadd.f32 %v873, %v874
      %v876 = vsel %vm435, %v845, 0.0
      %v877 = vrot.slane %v876, 4
      %v878 = vadd.f32 %v876, %v877
      %v879 = vrot.slane %v878, 2
      %v880 = vadd.f32 %v878, %v879
      %v881 = vrot.slane %v880, 1
      %v882 = vadd.f32 %v880, %v881
      %v883 = vsel %vm435, %v847, 0.0
      %v884 = vrot.slane %v883, 4
      %v885 = vadd.f32 %v883, %v884
      %v886 = vrot.slane %v885, 2
      %v887 = vadd.f32 %v885, %v886
      %v888 = vrot.slane %v887, 1
      %v889 = vadd.f32 %v887, %v888
      %v890 = vlog2.pop %v854
      %v891 = vmul.f32 %v890, 0.6931472
      %v892 = vlog2.pop %v861
      %v893 = vmul.f32 %v892, 0.6931472
      %v894 = vlog2.pop %v868
      %v895 = vmul.f32 %v894, 0.6931472
      %v896 = vlog2.pop %v875
      %v897 = vmul.f32 %v896, 0.6931472
      %v898 = vlog2.pop %v882
      %v899 = vmul.f32 %v898, 0.6931472
      %v900 = vlog2.pop %v889
      %v901 = vmul.f32 %v900, 0.6931472
      %v902 = vadd.f32 %v794, %v891
      %v903 = vadd.f32 %v801, %v893
      %v904 = vadd.f32 %v808, %v895
      %v905 = vadd.f32 %v815, %v897
      %v906 = vadd.f32 %v822, %v899
      %v907 = vadd.f32 %v829, %v901
      %v908 = vsub.f32 %v782, %v902
      %v909 = vsub.f32 %v783, %v903
      %v910 = vsub.f32 %v784, %v904
      %v911 = vsub.f32 %v785, %v905
      %v912 = vsub.f32 %v786, %v906
      %v913 = vsub.f32 %v787, %v907
      %v914 = vsel %vm435, %v908, -inf
      %v915 = vsel %vm435, %v910, -inf
      %v916 = vsel %vm435, %v912, -inf
      %v917 = vmax.f32 %v914, %v916
      %v918 = vmax.f32 %v917, %v915
      %v919 = vsel %vm435, %v909, -inf
      %v920 = vsel %vm435, %v911, -inf
      %v921 = vsel %vm435, %v913, -inf
      %v922 = vmax.f32 %v919, %v921
      %v923 = vmax.f32 %v922, %v920
      %v924 = vsub.f32 %v908, %v918
      %v925 = vsub.f32 %v909, %v923
      %v926 = vsub.f32 %v910, %v918
      %v927 = vsub.f32 %v911, %v923
      %v928 = vsub.f32 %v912, %v918
      %v929 = vsub.f32 %v913, %v923
      %v930 = vmul.f32 %v924, 1.442695
      %v931 = vpow.pop %v930
      %v932 = vmul.f32 %v925, 1.442695
      %v933 = vpow.pop %v932
      %v934 = vmul.f32 %v926, 1.442695
      %v935 = vpow.pop %v934
      %v936 = vmul.f32 %v927, 1.442695
      %v937 = vpow.pop %v936
      %v938 = vmul.f32 %v928, 1.442695
      %v939 = vpow.pop %v938
      %v940 = vmul.f32 %v929, 1.442695
      %v941 = vpow.pop %v940
      %v942 = vsel %vm435, %v931, 0.0
      %v943 = vsel %vm435, %v935, 0.0
      %v944 = vadd.f32 %v942, %v943
      %v945 = vsel %vm435, %v939, 0.0
      %v946 = vadd.f32 %v944, %v945
      %v947 = vsel %vm435, %v933, 0.0
      %v948 = vsel %vm435, %v937, 0.0
      %v949 = vadd.f32 %v947, %v948
      %v950 = vsel %vm435, %v941, 0.0
      %v951 = vadd.f32 %v949, %v950
      %v952 = vlog2.pop %v946
      %v953 = vmul.f32 %v952, 0.6931472
      %v954 = vlog2.pop %v951
      %v955 = vmul.f32 %v954, 0.6931472
      %v956 = vadd.f32 %v918, %v953
      %v957 = vadd.f32 %v923, %v955
      %v958 = vsub.f32 %v908, %v956
      %v959 = vsub.f32 %v909, %v957
      %v960 = vsub.f32 %v910, %v956
      %v961 = vsub.f32 %v911, %v957
      %v962 = vsub.f32 %v912, %v956
      %v963 = vsub.f32 %v913, %v957
      %v964 = vsel %vm435, %v958, -inf
      %v965 = vrot.slane %v964, 4
      %v966 = vmax.f32 %v964, %v965
      %v967 = vrot.slane %v966, 2
      %v968 = vmax.f32 %v966, %v967
      %v969 = vrot.slane %v968, 1
      %v970 = vmax.f32 %v968, %v969
      %v971 = vsel %vm435, %v959, -inf
      %v972 = vrot.slane %v971, 4
      %v973 = vmax.f32 %v971, %v972
      %v974 = vrot.slane %v973, 2
      %v975 = vmax.f32 %v973, %v974
      %v976 = vrot.slane %v975, 1
      %v977 = vmax.f32 %v975, %v976
      %v978 = vsel %vm435, %v960, -inf
      %v979 = vrot.slane %v978, 4
      %v980 = vmax.f32 %v978, %v979
      %v981 = vrot.slane %v980, 2
      %v982 = vmax.f32 %v980, %v981
      %v983 = vrot.slane %v982, 1
      %v984 = vmax.f32 %v982, %v983
      %v985 = vsel %vm435, %v961, -inf
      %v986 = vrot.slane %v985, 4
      %v987 = vmax.f32 %v985, %v986
      %v988 = vrot.slane %v987, 2
      %v989 = vmax.f32 %v987, %v988
      %v990 = vrot.slane %v989, 1
      %v991 = vmax.f32 %v989, %v990
      %v992 = vsel %vm435, %v962, -inf
      %v993 = vrot.slane %v992, 4
      %v994 = vmax.f32 %v992, %v993
      %v995 = vrot.slane %v994, 2
      %v996 = vmax.f32 %v994, %v995
      %v997 = vrot.slane %v996, 1
      %v998 = vmax.f32 %v996, %v997
      %v999 = vsel %vm435, %v963, -inf
      %v1000 = vrot.slane %v999, 4
      %v1001 = vmax.f32 %v999, %v1000
      %v1002 = vrot.slane %v1001, 2
      %v1003 = vmax.f32 %v1001, %v1002
      %v1004 = vrot.slane %v1003, 1
      %v1005 = vmax.f32 %v1003, %v1004
      %v1006 = vsub.f32 %v958, %v970
      %v1007 = vsub.f32 %v959, %v977
      %v1008 = vsub.f32 %v960, %v984
      %v1009 = vsub.f32 %v961, %v991
      %v1010 = vsub.f32 %v962, %v998
      %v1011 = vsub.f32 %v963, %v1005
      %v1012 = vmul.f32 %v1006, 1.442695
      %v1013 = vpow.pop %v1012
      %v1014 = vmul.f32 %v1007, 1.442695
      %v1015 = vpow.pop %v1014
      %v1016 = vmul.f32 %v1008, 1.442695
      %v1017 = vpow.pop %v1016
      %v1018 = vmul.f32 %v1009, 1.442695
      %v1019 = vpow.pop %v1018
      %v1020 = vmul.f32 %v1010, 1.442695
      %v1021 = vpow.pop %v1020
      %v1022 = vmul.f32 %v1011, 1.442695
      %v1023 = vpow.pop %v1022
      %v1024 = vsel %vm435, %v1013, 0.0
      %v1025 = vrot.slane %v1024, 4
      %v1026 = vadd.f32 %v1024, %v1025
      %v1027 = vrot.slane %v1026, 2
      %v1028 = vadd.f32 %v1026, %v1027
      %v1029 = vrot.slane %v1028, 1
      %v1030 = vadd.f32 %v1028, %v1029
      %v1031 = vsel %vm435, %v1015, 0.0
      %v1032 = vrot.slane %v1031, 4
      %v1033 = vadd.f32 %v1031, %v1032
      %v1034 = vrot.slane %v1033, 2
      %v1035 = vadd.f32 %v1033, %v1034
      %v1036 = vrot.slane %v1035, 1
      %v1037 = vadd.f32 %v1035, %v1036
      %v1038 = vsel %vm435, %v1017, 0.0
      %v1039 = vrot.slane %v1038, 4
      %v1040 = vadd.f32 %v1038, %v1039
      %v1041 = vrot.slane %v1040, 2
      %v1042 = vadd.f32 %v1040, %v1041
      %v1043 = vrot.slane %v1042, 1
      %v1044 = vadd.f32 %v1042, %v1043
      %v1045 = vsel %vm435, %v1019, 0.0
      %v1046 = vrot.slane %v1045, 4
      %v1047 = vadd.f32 %v1045, %v1046
      %v1048 = vrot.slane %v1047, 2
      %v1049 = vadd.f32 %v1047, %v1048
      %v1050 = vrot.slane %v1049, 1
      %v1051 = vadd.f32 %v1049, %v1050
      %v1052 = vsel %vm435, %v1021, 0.0
      %v1053 = vrot.slane %v1052, 4
      %v1054 = vadd.f32 %v1052, %v1053
      %v1055 = vrot.slane %v1054, 2
      %v1056 = vadd.f32 %v1054, %v1055
      %v1057 = vrot.slane %v1056, 1
      %v1058 = vadd.f32 %v1056, %v1057
      %v1059 = vsel %vm435, %v1023, 0.0
      %v1060 = vrot.slane %v1059, 4
      %v1061 = vadd.f32 %v1059, %v1060
      %v1062 = vrot.slane %v1061, 2
      %v1063 = vadd.f32 %v1061, %v1062
      %v1064 = vrot.slane %v1063, 1
      %v1065 = vadd.f32 %v1063, %v1064
      %v1066 = vlog2.pop %v1030
      %v1067 = vmul.f32 %v1066, 0.6931472
      %v1068 = vlog2.pop %v1037
      %v1069 = vmul.f32 %v1068, 0.6931472
      %v1070 = vlog2.pop %v1044
      %v1071 = vmul.f32 %v1070, 0.6931472
      %v1072 = vlog2.pop %v1051
      %v1073 = vmul.f32 %v1072, 0.6931472
      %v1074 = vlog2.pop %v1058
      %v1075 = vmul.f32 %v1074, 0.6931472
      %v1076 = vlog2.pop %v1065
      %v1077 = vmul.f32 %v1076, 0.6931472
      %v1078 = vadd.f32 %v970, %v1067
      %v1079 = vadd.f32 %v977, %v1069
      %v1080 = vadd.f32 %v984, %v1071
      %v1081 = vadd.f32 %v991, %v1073
      %v1082 = vadd.f32 %v998, %v1075
      %v1083 = vadd.f32 %v1005, %v1077
      %v1084 = vsub.f32 %v958, %v1078
      %v1085 = vsub.f32 %v959, %v1079
      %v1086 = vsub.f32 %v960, %v1080
      %v1087 = vsub.f32 %v961, %v1081
      %v1088 = vsub.f32 %v962, %v1082
      %v1089 = vsub.f32 %v963, %v1083
      %v1090 = vsel %vm435, %v1084, -inf
      %v1091 = vsel %vm435, %v1086, -inf
      %v1092 = vsel %vm435, %v1088, -inf
      %v1093 = vmax.f32 %v1090, %v1092
      %v1094 = vmax.f32 %v1093, %v1091
      %v1095 = vsel %vm435, %v1085, -inf
      %v1096 = vsel %vm435, %v1087, -inf
      %v1097 = vsel %vm435, %v1089, -inf
      %v1098 = vmax.f32 %v1095, %v1097
      %v1099 = vmax.f32 %v1098, %v1096
      %v1100 = vsub.f32 %v1084, %v1094
      %v1101 = vsub.f32 %v1085, %v1099
      %v1102 = vsub.f32 %v1086, %v1094
      %v1103 = vsub.f32 %v1087, %v1099
      %v1104 = vsub.f32 %v1088, %v1094
      %v1105 = vsub.f32 %v1089, %v1099
      %v1106 = vmul.f32 %v1100, 1.442695
      %v1107 = vpow.pop %v1106
      %v1108 = vmul.f32 %v1101, 1.442695
      %v1109 = vpow.pop %v1108
      %v1110 = vmul.f32 %v1102, 1.442695
      %v1111 = vpow.pop %v1110
      %v1112 = vmul.f32 %v1103, 1.442695
      %v1113 = vpow.pop %v1112
      %v1114 = vmul.f32 %v1104, 1.442695
      %v1115 = vpow.pop %v1114
      %v1116 = vmul.f32 %v1105, 1.442695
      %v1117 = vpow.pop %v1116
      %v1118 = vsel %vm435, %v1107, 0.0
      %v1119 = vsel %vm435, %v1111, 0.0
      %v1120 = vadd.f32 %v1118, %v1119
      %v1121 = vsel %vm435, %v1115, 0.0
      %v1122 = vadd.f32 %v1120, %v1121
      %v1123 = vsel %vm435, %v1109, 0.0
      %v1124 = vsel %vm435, %v1113, 0.0
      %v1125 = vadd.f32 %v1123, %v1124
      %v1126 = vsel %vm435, %v1117, 0.0
      %v1127 = vadd.f32 %v1125, %v1126
      %v1128 = vlog2.pop %v1122
      %v1129 = vmul.f32 %v1128, 0.6931472
      %v1130 = vlog2.pop %v1127
      %v1131 = vmul.f32 %v1130, 0.6931472
      %v1132 = vadd.f32 %v1094, %v1129
      %v1133 = vadd.f32 %v1099, %v1131
      %v1134 = vsub.f32 %v1084, %v1132
      %v1135 = vsub.f32 %v1085, %v1133
      %v1136 = vsub.f32 %v1086, %v1132
      %v1137 = vsub.f32 %v1087, %v1133
      %v1138 = vsub.f32 %v1088, %v1132
      %v1139 = vsub.f32 %v1089, %v1133
      %v1140 = vsel %vm435, %v1134, -inf
      %v1141 = vrot.slane %v1140, 4
      %v1142 = vmax.f32 %v1140, %v1141
      %v1143 = vrot.slane %v1142, 2
      %v1144 = vmax.f32 %v1142, %v1143
      %v1145 = vrot.slane %v1144, 1
      %v1146 = vmax.f32 %v1144, %v1145
      %v1147 = vsel %vm435, %v1135, -inf
      %v1148 = vrot.slane %v1147, 4
      %v1149 = vmax.f32 %v1147, %v1148
      %v1150 = vrot.slane %v1149, 2
      %v1151 = vmax.f32 %v1149, %v1150
      %v1152 = vrot.slane %v1151, 1
      %v1153 = vmax.f32 %v1151, %v1152
      %v1154 = vsel %vm435, %v1136, -inf
      %v1155 = vrot.slane %v1154, 4
      %v1156 = vmax.f32 %v1154, %v1155
      %v1157 = vrot.slane %v1156, 2
      %v1158 = vmax.f32 %v1156, %v1157
      %v1159 = vrot.slane %v1158, 1
      %v1160 = vmax.f32 %v1158, %v1159
      %v1161 = vsel %vm435, %v1137, -inf
      %v1162 = vrot.slane %v1161, 4
      %v1163 = vmax.f32 %v1161, %v1162
      %v1164 = vrot.slane %v1163, 2
      %v1165 = vmax.f32 %v1163, %v1164
      %v1166 = vrot.slane %v1165, 1
      %v1167 = vmax.f32 %v1165, %v1166
      %v1168 = vsel %vm435, %v1138, -inf
      %v1169 = vrot.slane %v1168, 4
      %v1170 = vmax.f32 %v1168, %v1169
      %v1171 = vrot.slane %v1170, 2
      %v1172 = vmax.f32 %v1170, %v1171
      %v1173 = vrot.slane %v1172, 1
      %v1174 = vmax.f32 %v1172, %v1173
      %v1175 = vsel %vm435, %v1139, -inf
      %v1176 = vrot.slane %v1175, 4
      %v1177 = vmax.f32 %v1175, %v1176
      %v1178 = vrot.slane %v1177, 2
      %v1179 = vmax.f32 %v1177, %v1178
      %v1180 = vrot.slane %v1179, 1
      %v1181 = vmax.f32 %v1179, %v1180
      %v1182 = vsub.f32 %v1134, %v1146
      %v1183 = vsub.f32 %v1135, %v1153
      %v1184 = vsub.f32 %v1136, %v1160
      %v1185 = vsub.f32 %v1137, %v1167
      %v1186 = vsub.f32 %v1138, %v1174
      %v1187 = vsub.f32 %v1139, %v1181
      %v1188 = vmul.f32 %v1182, 1.442695
      %v1189 = vpow.pop %v1188
      %v1190 = vmul.f32 %v1183, 1.442695
      %v1191 = vpow.pop %v1190
      %v1192 = vmul.f32 %v1184, 1.442695
      %v1193 = vpow.pop %v1192
      %v1194 = vmul.f32 %v1185, 1.442695
      %v1195 = vpow.pop %v1194
      %v1196 = vmul.f32 %v1186, 1.442695
      %v1197 = vpow.pop %v1196
      %v1198 = vmul.f32 %v1187, 1.442695
      %v1199 = vpow.pop %v1198
      %v1200 = vsel %vm435, %v1189, 0.0
      %v1201 = vrot.slane %v1200, 4
      %v1202 = vadd.f32 %v1200, %v1201
      %v1203 = vrot.slane %v1202, 2
      %v1204 = vadd.f32 %v1202, %v1203
      %v1205 = vrot.slane %v1204, 1
      %v1206 = vadd.f32 %v1204, %v1205
      %v1207 = vsel %vm435, %v1191, 0.0
      %v1208 = vrot.slane %v1207, 4
      %v1209 = vadd.f32 %v1207, %v1208
      %v1210 = vrot.slane %v1209, 2
      %v1211 = vadd.f32 %v1209, %v1210
      %v1212 = vrot.slane %v1211, 1
      %v1213 = vadd.f32 %v1211, %v1212
      %v1214 = vsel %vm435, %v1193, 0.0
      %v1215 = vrot.slane %v1214, 4
      %v1216 = vadd.f32 %v1214, %v1215
      %v1217 = vrot.slane %v1216, 2
      %v1218 = vadd.f32 %v1216, %v1217
      %v1219 = vrot.slane %v1218, 1
      %v1220 = vadd.f32 %v1218, %v1219
      %v1221 = vsel %vm435, %v1195, 0.0
      %v1222 = vrot.slane %v1221, 4
      %v1223 = vadd.f32 %v1221, %v1222
      %v1224 = vrot.slane %v1223, 2
      %v1225 = vadd.f32 %v1223, %v1224
      %v1226 = vrot.slane %v1225, 1
      %v1227 = vadd.f32 %v1225, %v1226
      %v1228 = vsel %vm435, %v1197, 0.0
      %v1229 = vrot.slane %v1228, 4
      %v1230 = vadd.f32 %v1228, %v1229
      %v1231 = vrot.slane %v1230, 2
      %v1232 = vadd.f32 %v1230, %v1231
      %v1233 = vrot.slane %v1232, 1
      %v1234 = vadd.f32 %v1232, %v1233
      %v1235 = vsel %vm435, %v1199, 0.0
      %v1236 = vrot.slane %v1235, 4
      %v1237 = vadd.f32 %v1235, %v1236
      %v1238 = vrot.slane %v1237, 2
      %v1239 = vadd.f32 %v1237, %v1238
      %v1240 = vrot.slane %v1239, 1
      %v1241 = vadd.f32 %v1239, %v1240
      %v1242 = vlog2.pop %v1206
      %v1243 = vmul.f32 %v1242, 0.6931472
      %v1244 = vlog2.pop %v1213
      %v1245 = vmul.f32 %v1244, 0.6931472
      %v1246 = vlog2.pop %v1220
      %v1247 = vmul.f32 %v1246, 0.6931472
      %v1248 = vlog2.pop %v1227
      %v1249 = vmul.f32 %v1248, 0.6931472
      %v1250 = vlog2.pop %v1234
      %v1251 = vmul.f32 %v1250, 0.6931472
      %v1252 = vlog2.pop %v1241
      %v1253 = vmul.f32 %v1252, 0.6931472
      %v1254 = vadd.f32 %v1146, %v1243
      %v1255 = vadd.f32 %v1153, %v1245
      %v1256 = vadd.f32 %v1160, %v1247
      %v1257 = vadd.f32 %v1167, %v1249
      %v1258 = vadd.f32 %v1174, %v1251
      %v1259 = vadd.f32 %v1181, %v1253
      %v1260 = vsub.f32 %v1134, %v1254
      %v1261 = vsub.f32 %v1135, %v1255
      %v1262 = vsub.f32 %v1136, %v1256
      %v1263 = vsub.f32 %v1137, %v1257
      %v1264 = vsub.f32 %v1138, %v1258
      %v1265 = vsub.f32 %v1139, %v1259
      %v1266 = vsel %vm435, %v1260, -inf
      %v1267 = vsel %vm435, %v1262, -inf
      %v1268 = vsel %vm435, %v1264, -inf
      %v1269 = vmax.f32 %v1266, %v1268
      %v1270 = vmax.f32 %v1269, %v1267
      %v1271 = vsel %vm435, %v1261, -inf
      %v1272 = vsel %vm435, %v1263, -inf
      %v1273 = vsel %vm435, %v1265, -inf
      %v1274 = vmax.f32 %v1271, %v1273
      %v1275 = vmax.f32 %v1274, %v1272
      %v1276 = vsub.f32 %v1260, %v1270
      %v1277 = vsub.f32 %v1261, %v1275
      %v1278 = vsub.f32 %v1262, %v1270
      %v1279 = vsub.f32 %v1263, %v1275
      %v1280 = vsub.f32 %v1264, %v1270
      %v1281 = vsub.f32 %v1265, %v1275
      %v1282 = vmul.f32 %v1276, 1.442695
      %v1283 = vpow.pop %v1282
      %v1284 = vmul.f32 %v1277, 1.442695
      %v1285 = vpow.pop %v1284
      %v1286 = vmul.f32 %v1278, 1.442695
      %v1287 = vpow.pop %v1286
      %v1288 = vmul.f32 %v1279, 1.442695
      %v1289 = vpow.pop %v1288
      %v1290 = vmul.f32 %v1280, 1.442695
      %v1291 = vpow.pop %v1290
      %v1292 = vmul.f32 %v1281, 1.442695
      %v1293 = vpow.pop %v1292
      %v1294 = vsel %vm435, %v1283, 0.0
      %v1295 = vsel %vm435, %v1287, 0.0
      %v1296 = vadd.f32 %v1294, %v1295
      %v1297 = vsel %vm435, %v1291, 0.0
      %v1298 = vadd.f32 %v1296, %v1297
      %v1299 = vsel %vm435, %v1285, 0.0
      %v1300 = vsel %vm435, %v1289, 0.0
      %v1301 = vadd.f32 %v1299, %v1300
      %v1302 = vsel %vm435, %v1293, 0.0
      %v1303 = vadd.f32 %v1301, %v1302
      %v1304 = vlog2.pop %v1298
      %v1305 = vmul.f32 %v1304, 0.6931472
      %v1306 = vlog2.pop %v1303
      %v1307 = vmul.f32 %v1306, 0.6931472
      %v1308 = vadd.f32 %v1270, %v1305
      %v1309 = vadd.f32 %v1275, %v1307
      %v1310 = vsub.f32 %v1260, %v1308
      %v1311 = vsub.f32 %v1261, %v1309
      %v1312 = vsub.f32 %v1262, %v1308
      %v1313 = vsub.f32 %v1263, %v1309
      %v1314 = vsub.f32 %v1264, %v1308
      %v1315 = vsub.f32 %v1265, %v1309
      %v1316 = vsel %vm435, %v1310, -inf
      %v1317 = vrot.slane %v1316, 4
      %v1318 = vmax.f32 %v1316, %v1317
      %v1319 = vrot.slane %v1318, 2
      %v1320 = vmax.f32 %v1318, %v1319
      %v1321 = vrot.slane %v1320, 1
      %v1322 = vmax.f32 %v1320, %v1321
      %v1323 = vsel %vm435, %v1311, -inf
      %v1324 = vrot.slane %v1323, 4
      %v1325 = vmax.f32 %v1323, %v1324
      %v1326 = vrot.slane %v1325, 2
      %v1327 = vmax.f32 %v1325, %v1326
      %v1328 = vrot.slane %v1327, 1
      %v1329 = vmax.f32 %v1327, %v1328
      %v1330 = vsel %vm435, %v1312, -inf
      %v1331 = vrot.slane %v1330, 4
      %v1332 = vmax.f32 %v1330, %v1331
      %v1333 = vrot.slane %v1332, 2
      %v1334 = vmax.f32 %v1332, %v1333
      %v1335 = vrot.slane %v1334, 1
      %v1336 = vmax.f32 %v1334, %v1335
      %v1337 = vsel %vm435, %v1313, -inf
      %v1338 = vrot.slane %v1337, 4
      %v1339 = vmax.f32 %v1337, %v1338
      %v1340 = vrot.slane %v1339, 2
      %v1341 = vmax.f32 %v1339, %v1340
      %v1342 = vrot.slane %v1341, 1
      %v1343 = vmax.f32 %v1341, %v1342
      %v1344 = vsel %vm435, %v1314, -inf
      %v1345 = vrot.slane %v1344, 4
      %v1346 = vmax.f32 %v1344, %v1345
      %v1347 = vrot.slane %v1346, 2
      %v1348 = vmax.f32 %v1346, %v1347
      %v1349 = vrot.slane %v1348, 1
      %v1350 = vmax.f32 %v1348, %v1349
      %v1351 = vsel %vm435, %v1315, -inf
      %v1352 = vrot.slane %v1351, 4
      %v1353 = vmax.f32 %v1351, %v1352
      %v1354 = vrot.slane %v1353, 2
      %v1355 = vmax.f32 %v1353, %v1354
      %v1356 = vrot.slane %v1355, 1
      %v1357 = vmax.f32 %v1355, %v1356
      %v1358 = vsub.f32 %v1310, %v1322
      %v1359 = vsub.f32 %v1311, %v1329
      %v1360 = vsub.f32 %v1312, %v1336
      %v1361 = vsub.f32 %v1313, %v1343
      %v1362 = vsub.f32 %v1314, %v1350
      %v1363 = vsub.f32 %v1315, %v1357
      %v1364 = vmul.f32 %v1358, 1.442695
      %v1365 = vpow.pop %v1364
      %v1366 = vmul.f32 %v1359, 1.442695
      %v1367 = vpow.pop %v1366
      %v1368 = vmul.f32 %v1360, 1.442695
      %v1369 = vpow.pop %v1368
      %v1370 = vmul.f32 %v1361, 1.442695
      %v1371 = vpow.pop %v1370
      %v1372 = vmul.f32 %v1362, 1.442695
      %v1373 = vpow.pop %v1372
      %v1374 = vmul.f32 %v1363, 1.442695
      %v1375 = vpow.pop %v1374
      %v1376 = vsel %vm435, %v1365, 0.0
      %v1377 = vrot.slane %v1376, 4
      %v1378 = vadd.f32 %v1376, %v1377
      %v1379 = vrot.slane %v1378, 2
      %v1380 = vadd.f32 %v1378, %v1379
      %v1381 = vrot.slane %v1380, 1
      %v1382 = vadd.f32 %v1380, %v1381
      %v1383 = vsel %vm435, %v1367, 0.0
      %v1384 = vrot.slane %v1383, 4
      %v1385 = vadd.f32 %v1383, %v1384
      %v1386 = vrot.slane %v1385, 2
      %v1387 = vadd.f32 %v1385, %v1386
      %v1388 = vrot.slane %v1387, 1
      %v1389 = vadd.f32 %v1387, %v1388
      %v1390 = vsel %vm435, %v1369, 0.0
      %v1391 = vrot.slane %v1390, 4
      %v1392 = vadd.f32 %v1390, %v1391
      %v1393 = vrot.slane %v1392, 2
      %v1394 = vadd.f32 %v1392, %v1393
      %v1395 = vrot.slane %v1394, 1
      %v1396 = vadd.f32 %v1394, %v1395
      %v1397 = vsel %vm435, %v1371, 0.0
      %v1398 = vrot.slane %v1397, 4
      %v1399 = vadd.f32 %v1397, %v1398
      %v1400 = vrot.slane %v1399, 2
      %v1401 = vadd.f32 %v1399, %v1400
      %v1402 = vrot.slane %v1401, 1
      %v1403 = vadd.f32 %v1401, %v1402
      %v1404 = vsel %vm435, %v1373, 0.0
      %v1405 = vrot.slane %v1404, 4
      %v1406 = vadd.f32 %v1404, %v1405
      %v1407 = vrot.slane %v1406, 2
      %v1408 = vadd.f32 %v1406, %v1407
      %v1409 = vrot.slane %v1408, 1
      %v1410 = vadd.f32 %v1408, %v1409
      %v1411 = vsel %vm435, %v1375, 0.0
      %v1412 = vrot.slane %v1411, 4
      %v1413 = vadd.f32 %v1411, %v1412
      %v1414 = vrot.slane %v1413, 2
      %v1415 = vadd.f32 %v1413, %v1414
      %v1416 = vrot.slane %v1415, 1
      %v1417 = vadd.f32 %v1415, %v1416
      %v1418 = vlog2.pop %v1382
      %v1419 = vmul.f32 %v1418, 0.6931472
      %v1420 = vlog2.pop %v1389
      %v1421 = vmul.f32 %v1420, 0.6931472
      %v1422 = vlog2.pop %v1396
      %v1423 = vmul.f32 %v1422, 0.6931472
      %v1424 = vlog2.pop %v1403
      %v1425 = vmul.f32 %v1424, 0.6931472
      %v1426 = vlog2.pop %v1410
      %v1427 = vmul.f32 %v1426, 0.6931472
      %v1428 = vlog2.pop %v1417
      %v1429 = vmul.f32 %v1428, 0.6931472
      %v1430 = vadd.f32 %v1322, %v1419
      %v1431 = vadd.f32 %v1329, %v1421
      %v1432 = vadd.f32 %v1336, %v1423
      %v1433 = vadd.f32 %v1343, %v1425
      %v1434 = vadd.f32 %v1350, %v1427
      %v1435 = vadd.f32 %v1357, %v1429
      %v1436 = vsub.f32 %v1310, %v1430
      %v1437 = vsub.f32 %v1311, %v1431
      %v1438 = vsub.f32 %v1312, %v1432
      %v1439 = vsub.f32 %v1313, %v1433
      %v1440 = vsub.f32 %v1314, %v1434
      %v1441 = vsub.f32 %v1315, %v1435
      %v1442 = vsel %vm435, %v1436, -inf
      %v1443 = vsel %vm435, %v1438, -inf
      %v1444 = vsel %vm435, %v1440, -inf
      %v1445 = vmax.f32 %v1442, %v1444
      %v1446 = vmax.f32 %v1445, %v1443
      %v1447 = vsel %vm435, %v1437, -inf
      %v1448 = vsel %vm435, %v1439, -inf
      %v1449 = vsel %vm435, %v1441, -inf
      %v1450 = vmax.f32 %v1447, %v1449
      %v1451 = vmax.f32 %v1450, %v1448
      %v1452 = vsub.f32 %v1436, %v1446
      %v1453 = vsub.f32 %v1437, %v1451
      %v1454 = vsub.f32 %v1438, %v1446
      %v1455 = vsub.f32 %v1439, %v1451
      %v1456 = vsub.f32 %v1440, %v1446
      %v1457 = vsub.f32 %v1441, %v1451
      %v1458 = vmul.f32 %v1452, 1.442695
      %v1459 = vpow.pop %v1458
      %v1460 = vmul.f32 %v1453, 1.442695
      %v1461 = vpow.pop %v1460
      %v1462 = vmul.f32 %v1454, 1.442695
      %v1463 = vpow.pop %v1462
      %v1464 = vmul.f32 %v1455, 1.442695
      %v1465 = vpow.pop %v1464
      %v1466 = vmul.f32 %v1456, 1.442695
      %v1467 = vpow.pop %v1466
      %v1468 = vmul.f32 %v1457, 1.442695
      %v1469 = vpow.pop %v1468
      %v1470 = vsel %vm435, %v1459, 0.0
      %v1471 = vsel %vm435, %v1463, 0.0
      %v1472 = vadd.f32 %v1470, %v1471
      %v1473 = vsel %vm435, %v1467, 0.0
      %v1474 = vadd.f32 %v1472, %v1473
      %v1475 = vsel %vm435, %v1461, 0.0
      %v1476 = vsel %vm435, %v1465, 0.0
      %v1477 = vadd.f32 %v1475, %v1476
      %v1478 = vsel %vm435, %v1469, 0.0
      %v1479 = vadd.f32 %v1477, %v1478
      %v1480 = vlog2.pop %v1474
      %v1481 = vmul.f32 %v1480, 0.6931472
      %v1482 = vlog2.pop %v1479
      %v1483 = vmul.f32 %v1482, 0.6931472
      %v1484 = vadd.f32 %v1446, %v1481
      %v1485 = vadd.f32 %v1451, %v1483
      %v1486 = vsub.f32 %v1436, %v1484
      %v1487 = vsub.f32 %v1437, %v1485
      %v1488 = vsub.f32 %v1438, %v1484
      %v1489 = vsub.f32 %v1439, %v1485
      %v1490 = vsub.f32 %v1440, %v1484
      %v1491 = vsub.f32 %v1441, %v1485
      %v1492 = vsel %vm435, %v1486, -inf
      %v1493 = vrot.slane %v1492, 4
      %v1494 = vmax.f32 %v1492, %v1493
      %v1495 = vrot.slane %v1494, 2
      %v1496 = vmax.f32 %v1494, %v1495
      %v1497 = vrot.slane %v1496, 1
      %v1498 = vmax.f32 %v1496, %v1497
      %v1499 = vsel %vm435, %v1487, -inf
      %v1500 = vrot.slane %v1499, 4
      %v1501 = vmax.f32 %v1499, %v1500
      %v1502 = vrot.slane %v1501, 2
      %v1503 = vmax.f32 %v1501, %v1502
      %v1504 = vrot.slane %v1503, 1
      %v1505 = vmax.f32 %v1503, %v1504
      %v1506 = vsel %vm435, %v1488, -inf
      %v1507 = vrot.slane %v1506, 4
      %v1508 = vmax.f32 %v1506, %v1507
      %v1509 = vrot.slane %v1508, 2
      %v1510 = vmax.f32 %v1508, %v1509
      %v1511 = vrot.slane %v1510, 1
      %v1512 = vmax.f32 %v1510, %v1511
      %v1513 = vsel %vm435, %v1489, -inf
      %v1514 = vrot.slane %v1513, 4
      %v1515 = vmax.f32 %v1513, %v1514
      %v1516 = vrot.slane %v1515, 2
      %v1517 = vmax.f32 %v1515, %v1516
      %v1518 = vrot.slane %v1517, 1
      %v1519 = vmax.f32 %v1517, %v1518
      %v1520 = vsel %vm435, %v1490, -inf
      %v1521 = vrot.slane %v1520, 4
      %v1522 = vmax.f32 %v1520, %v1521
      %v1523 = vrot.slane %v1522, 2
      %v1524 = vmax.f32 %v1522, %v1523
      %v1525 = vrot.slane %v1524, 1
      %v1526 = vmax.f32 %v1524, %v1525
      %v1527 = vsel %vm435, %v1491, -inf
      %v1528 = vrot.slane %v1527, 4
      %v1529 = vmax.f32 %v1527, %v1528
      %v1530 = vrot.slane %v1529, 2
      %v1531 = vmax.f32 %v1529, %v1530
      %v1532 = vrot.slane %v1531, 1
      %v1533 = vmax.f32 %v1531, %v1532
      %v1534 = vsub.f32 %v1486, %v1498
      %v1535 = vsub.f32 %v1487, %v1505
      %v1536 = vsub.f32 %v1488, %v1512
      %v1537 = vsub.f32 %v1489, %v1519
      %v1538 = vsub.f32 %v1490, %v1526
      %v1539 = vsub.f32 %v1491, %v1533
      %v1540 = vmul.f32 %v1534, 1.442695
      %v1541 = vpow.pop %v1540
      %v1542 = vmul.f32 %v1535, 1.442695
      %v1543 = vpow.pop %v1542
      %v1544 = vmul.f32 %v1536, 1.442695
      %v1545 = vpow.pop %v1544
      %v1546 = vmul.f32 %v1537, 1.442695
      %v1547 = vpow.pop %v1546
      %v1548 = vmul.f32 %v1538, 1.442695
      %v1549 = vpow.pop %v1548
      %v1550 = vmul.f32 %v1539, 1.442695
      %v1551 = vpow.pop %v1550
      %v1552 = vsel %vm435, %v1541, 0.0
      %v1553 = vrot.slane %v1552, 4
      %v1554 = vadd.f32 %v1552, %v1553
      %v1555 = vrot.slane %v1554, 2
      %v1556 = vadd.f32 %v1554, %v1555
      %v1557 = vrot.slane %v1556, 1
      %v1558 = vadd.f32 %v1556, %v1557
      %v1559 = vsel %vm435, %v1543, 0.0
      %v1560 = vrot.slane %v1559, 4
      %v1561 = vadd.f32 %v1559, %v1560
      %v1562 = vrot.slane %v1561, 2
      %v1563 = vadd.f32 %v1561, %v1562
      %v1564 = vrot.slane %v1563, 1
      %v1565 = vadd.f32 %v1563, %v1564
      %v1566 = vsel %vm435, %v1545, 0.0
      %v1567 = vrot.slane %v1566, 4
      %v1568 = vadd.f32 %v1566, %v1567
      %v1569 = vrot.slane %v1568, 2
      %v1570 = vadd.f32 %v1568, %v1569
      %v1571 = vrot.slane %v1570, 1
      %v1572 = vadd.f32 %v1570, %v1571
      %v1573 = vsel %vm435, %v1547, 0.0
      %v1574 = vrot.slane %v1573, 4
      %v1575 = vadd.f32 %v1573, %v1574
      %v1576 = vrot.slane %v1575, 2
      %v1577 = vadd.f32 %v1575, %v1576
      %v1578 = vrot.slane %v1577, 1
      %v1579 = vadd.f32 %v1577, %v1578
      %v1580 = vsel %vm435, %v1549, 0.0
      %v1581 = vrot.slane %v1580, 4
      %v1582 = vadd.f32 %v1580, %v1581
      %v1583 = vrot.slane %v1582, 2
      %v1584 = vadd.f32 %v1582, %v1583
      %v1585 = vrot.slane %v1584, 1
      %v1586 = vadd.f32 %v1584, %v1585
      %v1587 = vsel %vm435, %v1551, 0.0
      %v1588 = vrot.slane %v1587, 4
      %v1589 = vadd.f32 %v1587, %v1588
      %v1590 = vrot.slane %v1589, 2
      %v1591 = vadd.f32 %v1589, %v1590
      %v1592 = vrot.slane %v1591, 1
      %v1593 = vadd.f32 %v1591, %v1592
      %v1594 = vlog2.pop %v1558
      %v1595 = vmul.f32 %v1594, 0.6931472
      %v1596 = vlog2.pop %v1565
      %v1597 = vmul.f32 %v1596, 0.6931472
      %v1598 = vlog2.pop %v1572
      %v1599 = vmul.f32 %v1598, 0.6931472
      %v1600 = vlog2.pop %v1579
      %v1601 = vmul.f32 %v1600, 0.6931472
      %v1602 = vlog2.pop %v1586
      %v1603 = vmul.f32 %v1602, 0.6931472
      %v1604 = vlog2.pop %v1593
      %v1605 = vmul.f32 %v1604, 0.6931472
      %v1606 = vadd.f32 %v1498, %v1595
      %v1607 = vadd.f32 %v1505, %v1597
      %v1608 = vadd.f32 %v1512, %v1599
      %v1609 = vadd.f32 %v1519, %v1601
      %v1610 = vadd.f32 %v1526, %v1603
      %v1611 = vadd.f32 %v1533, %v1605
      %v1612 = vsub.f32 %v1486, %v1606
      %v1613 = vsub.f32 %v1487, %v1607
      %v1614 = vsub.f32 %v1488, %v1608
      %v1615 = vsub.f32 %v1489, %v1609
      %v1616 = vsub.f32 %v1490, %v1610
      %v1617 = vsub.f32 %v1491, %v1611
      %v1618 = vsel %vm435, %v1612, -inf
      %v1619 = vsel %vm435, %v1614, -inf
      %v1620 = vsel %vm435, %v1616, -inf
      %v1621 = vmax.f32 %v1618, %v1620
      %v1622 = vmax.f32 %v1621, %v1619
      %v1623 = vsel %vm435, %v1613, -inf
      %v1624 = vsel %vm435, %v1615, -inf
      %v1625 = vsel %vm435, %v1617, -inf
      %v1626 = vmax.f32 %v1623, %v1625
      %v1627 = vmax.f32 %v1626, %v1624
      %v1628 = vsub.f32 %v1612, %v1622
      %v1629 = vsub.f32 %v1613, %v1627
      %v1630 = vsub.f32 %v1614, %v1622
      %v1631 = vsub.f32 %v1615, %v1627
      %v1632 = vsub.f32 %v1616, %v1622
      %v1633 = vsub.f32 %v1617, %v1627
      %v1634 = vmul.f32 %v1628, 1.442695
      %v1635 = vpow.pop %v1634
      %v1636 = vmul.f32 %v1629, 1.442695
      %v1637 = vpow.pop %v1636
      %v1638 = vmul.f32 %v1630, 1.442695
      %v1639 = vpow.pop %v1638
      %v1640 = vmul.f32 %v1631, 1.442695
      %v1641 = vpow.pop %v1640
      %v1642 = vmul.f32 %v1632, 1.442695
      %v1643 = vpow.pop %v1642
      %v1644 = vmul.f32 %v1633, 1.442695
      %v1645 = vpow.pop %v1644
      %v1646 = vsel %vm435, %v1635, 0.0
      %v1647 = vsel %vm435, %v1639, 0.0
      %v1648 = vadd.f32 %v1646, %v1647
      %v1649 = vsel %vm435, %v1643, 0.0
      %v1650 = vadd.f32 %v1648, %v1649
      %v1651 = vsel %vm435, %v1637, 0.0
      %v1652 = vsel %vm435, %v1641, 0.0
      %v1653 = vadd.f32 %v1651, %v1652
      %v1654 = vsel %vm435, %v1645, 0.0
      %v1655 = vadd.f32 %v1653, %v1654
      %v1656 = vlog2.pop %v1650
      %v1657 = vmul.f32 %v1656, 0.6931472
      %v1658 = vlog2.pop %v1655
      %v1659 = vmul.f32 %v1658, 0.6931472
      %v1660 = vadd.f32 %v1622, %v1657
      %v1661 = vadd.f32 %v1627, %v1659
      %v1662 = vsub.f32 %v1612, %v1660
      %v1663 = vsub.f32 %v1613, %v1661
      %v1664 = vsub.f32 %v1614, %v1660
      %v1665 = vsub.f32 %v1615, %v1661
      %v1666 = vsub.f32 %v1616, %v1660
      %v1667 = vsub.f32 %v1617, %v1661
      %v1668 = vsel %vm435, %v1662, -inf
      %v1669 = vrot.slane %v1668, 4
      %v1670 = vmax.f32 %v1668, %v1669
      %v1671 = vrot.slane %v1670, 2
      %v1672 = vmax.f32 %v1670, %v1671
      %v1673 = vrot.slane %v1672, 1
      %v1674 = vmax.f32 %v1672, %v1673
      %v1675 = vsel %vm435, %v1663, -inf
      %v1676 = vrot.slane %v1675, 4
      %v1677 = vmax.f32 %v1675, %v1676
      %v1678 = vrot.slane %v1677, 2
      %v1679 = vmax.f32 %v1677, %v1678
      %v1680 = vrot.slane %v1679, 1
      %v1681 = vmax.f32 %v1679, %v1680
      %v1682 = vsel %vm435, %v1664, -inf
      %v1683 = vrot.slane %v1682, 4
      %v1684 = vmax.f32 %v1682, %v1683
      %v1685 = vrot.slane %v1684, 2
      %v1686 = vmax.f32 %v1684, %v1685
      %v1687 = vrot.slane %v1686, 1
      %v1688 = vmax.f32 %v1686, %v1687
      %v1689 = vsel %vm435, %v1665, -inf
      %v1690 = vrot.slane %v1689, 4
      %v1691 = vmax.f32 %v1689, %v1690
      %v1692 = vrot.slane %v1691, 2
      %v1693 = vmax.f32 %v1691, %v1692
      %v1694 = vrot.slane %v1693, 1
      %v1695 = vmax.f32 %v1693, %v1694
      %v1696 = vsel %vm435, %v1666, -inf
      %v1697 = vrot.slane %v1696, 4
      %v1698 = vmax.f32 %v1696, %v1697
      %v1699 = vrot.slane %v1698, 2
      %v1700 = vmax.f32 %v1698, %v1699
      %v1701 = vrot.slane %v1700, 1
      %v1702 = vmax.f32 %v1700, %v1701
      %v1703 = vsel %vm435, %v1667, -inf
      %v1704 = vrot.slane %v1703, 4
      %v1705 = vmax.f32 %v1703, %v1704
      %v1706 = vrot.slane %v1705, 2
      %v1707 = vmax.f32 %v1705, %v1706
      %v1708 = vrot.slane %v1707, 1
      %v1709 = vmax.f32 %v1707, %v1708
      %v1710 = vsub.f32 %v1662, %v1674
      %v1711 = vsub.f32 %v1663, %v1681
      %v1712 = vsub.f32 %v1664, %v1688
      %v1713 = vsub.f32 %v1665, %v1695
      %v1714 = vsub.f32 %v1666, %v1702
      %v1715 = vsub.f32 %v1667, %v1709
      %v1716 = vmul.f32 %v1710, 1.442695
      %v1717 = vpow.pop %v1716
      %v1718 = vmul.f32 %v1711, 1.442695
      %v1719 = vpow.pop %v1718
      %v1720 = vmul.f32 %v1712, 1.442695
      %v1721 = vpow.pop %v1720
      %v1722 = vmul.f32 %v1713, 1.442695
      %v1723 = vpow.pop %v1722
      %v1724 = vmul.f32 %v1714, 1.442695
      %v1725 = vpow.pop %v1724
      %v1726 = vmul.f32 %v1715, 1.442695
      %v1727 = vpow.pop %v1726
      %v1728 = vsel %vm435, %v1717, 0.0
      %v1729 = vrot.slane %v1728, 4
      %v1730 = vadd.f32 %v1728, %v1729
      %v1731 = vrot.slane %v1730, 2
      %v1732 = vadd.f32 %v1730, %v1731
      %v1733 = vrot.slane %v1732, 1
      %v1734 = vadd.f32 %v1732, %v1733
      %v1735 = vsel %vm435, %v1719, 0.0
      %v1736 = vrot.slane %v1735, 4
      %v1737 = vadd.f32 %v1735, %v1736
      %v1738 = vrot.slane %v1737, 2
      %v1739 = vadd.f32 %v1737, %v1738
      %v1740 = vrot.slane %v1739, 1
      %v1741 = vadd.f32 %v1739, %v1740
      %v1742 = vsel %vm435, %v1721, 0.0
      %v1743 = vrot.slane %v1742, 4
      %v1744 = vadd.f32 %v1742, %v1743
      %v1745 = vrot.slane %v1744, 2
      %v1746 = vadd.f32 %v1744, %v1745
      %v1747 = vrot.slane %v1746, 1
      %v1748 = vadd.f32 %v1746, %v1747
      %v1749 = vsel %vm435, %v1723, 0.0
      %v1750 = vrot.slane %v1749, 4
      %v1751 = vadd.f32 %v1749, %v1750
      %v1752 = vrot.slane %v1751, 2
      %v1753 = vadd.f32 %v1751, %v1752
      %v1754 = vrot.slane %v1753, 1
      %v1755 = vadd.f32 %v1753, %v1754
      %v1756 = vsel %vm435, %v1725, 0.0
      %v1757 = vrot.slane %v1756, 4
      %v1758 = vadd.f32 %v1756, %v1757
      %v1759 = vrot.slane %v1758, 2
      %v1760 = vadd.f32 %v1758, %v1759
      %v1761 = vrot.slane %v1760, 1
      %v1762 = vadd.f32 %v1760, %v1761
      %v1763 = vsel %vm435, %v1727, 0.0
      %v1764 = vrot.slane %v1763, 4
      %v1765 = vadd.f32 %v1763, %v1764
      %v1766 = vrot.slane %v1765, 2
      %v1767 = vadd.f32 %v1765, %v1766
      %v1768 = vrot.slane %v1767, 1
      %v1769 = vadd.f32 %v1767, %v1768
      %v1770 = vlog2.pop %v1734
      %v1771 = vmul.f32 %v1770, 0.6931472
      %v1772 = vlog2.pop %v1741
      %v1773 = vmul.f32 %v1772, 0.6931472
      %v1774 = vlog2.pop %v1748
      %v1775 = vmul.f32 %v1774, 0.6931472
      %v1776 = vlog2.pop %v1755
      %v1777 = vmul.f32 %v1776, 0.6931472
      %v1778 = vlog2.pop %v1762
      %v1779 = vmul.f32 %v1778, 0.6931472
      %v1780 = vlog2.pop %v1769
      %v1781 = vmul.f32 %v1780, 0.6931472
      %v1782 = vadd.f32 %v1674, %v1771
      %v1783 = vadd.f32 %v1681, %v1773
      %v1784 = vadd.f32 %v1688, %v1775
      %v1785 = vadd.f32 %v1695, %v1777
      %v1786 = vadd.f32 %v1702, %v1779
      %v1787 = vadd.f32 %v1709, %v1781
      %v1788 = vsub.f32 %v1662, %v1782
      %v1789 = vsub.f32 %v1663, %v1783
      %v1790 = vsub.f32 %v1664, %v1784
      %v1791 = vsub.f32 %v1665, %v1785
      %v1792 = vsub.f32 %v1666, %v1786
      %v1793 = vsub.f32 %v1667, %v1787
      %v1794 = vsel %vm435, %v1788, -inf
      %v1795 = vsel %vm435, %v1790, -inf
      %v1796 = vsel %vm435, %v1792, -inf
      %v1797 = vmax.f32 %v1794, %v1796
      %v1798 = vmax.f32 %v1797, %v1795
      %v1799 = vsel %vm435, %v1789, -inf
      %v1800 = vsel %vm435, %v1791, -inf
      %v1801 = vsel %vm435, %v1793, -inf
      %v1802 = vmax.f32 %v1799, %v1801
      %v1803 = vmax.f32 %v1802, %v1800
      %v1804 = vsub.f32 %v1788, %v1798
      %v1805 = vsub.f32 %v1789, %v1803
      %v1806 = vsub.f32 %v1790, %v1798
      %v1807 = vsub.f32 %v1791, %v1803
      %v1808 = vsub.f32 %v1792, %v1798
      %v1809 = vsub.f32 %v1793, %v1803
      %v1810 = vmul.f32 %v1804, 1.442695
      %v1811 = vpow.pop %v1810
      %v1812 = vmul.f32 %v1805, 1.442695
      %v1813 = vpow.pop %v1812
      %v1814 = vmul.f32 %v1806, 1.442695
      %v1815 = vpow.pop %v1814
      %v1816 = vmul.f32 %v1807, 1.442695
      %v1817 = vpow.pop %v1816
      %v1818 = vmul.f32 %v1808, 1.442695
      %v1819 = vpow.pop %v1818
      %v1820 = vmul.f32 %v1809, 1.442695
      %v1821 = vpow.pop %v1820
      %v1822 = vsel %vm435, %v1811, 0.0
      %v1823 = vsel %vm435, %v1815, 0.0
      %v1824 = vadd.f32 %v1822, %v1823
      %v1825 = vsel %vm435, %v1819, 0.0
      %v1826 = vadd.f32 %v1824, %v1825
      %v1827 = vsel %vm435, %v1813, 0.0
      %v1828 = vsel %vm435, %v1817, 0.0
      %v1829 = vadd.f32 %v1827, %v1828
      %v1830 = vsel %vm435, %v1821, 0.0
      %v1831 = vadd.f32 %v1829, %v1830
      %v1832 = vlog2.pop %v1826
      %v1833 = vmul.f32 %v1832, 0.6931472
      %v1834 = vlog2.pop %v1831
      %v1835 = vmul.f32 %v1834, 0.6931472
      %v1836 = vadd.f32 %v1798, %v1833
      %v1837 = vadd.f32 %v1803, %v1835
      %v1838 = vsub.f32 %v1788, %v1836
      %v1839 = vsub.f32 %v1789, %v1837
      %v1840 = vsub.f32 %v1790, %v1836
      %v1841 = vsub.f32 %v1791, %v1837
      %v1842 = vsub.f32 %v1792, %v1836
      %v1843 = vsub.f32 %v1793, %v1837
      %v1844 = vmul.f32 %v1838, 1.442695
      %v1845 = vpow.pop %v1844
      %v1846 = vmul.f32 %v1839, 1.442695
      %v1847 = vpow.pop %v1846
      %v1848 = vmul.f32 %v1840, 1.442695
      %v1849 = vpow.pop %v1848
      %v1850 = vmul.f32 %v1841, 1.442695
      %v1851 = vpow.pop %v1850
      %v1852 = vmul.f32 %v1842, 1.442695
      %v1853 = vpow.pop %v1852
      %v1854 = vmul.f32 %v1843, 1.442695
      %v1855 = vpow.pop %v1854
      %1856 = vst.msk [vmem:[%s234] sm:$0xf] %vm435, %v1845
      %1857 = vst.msk [vmem:[%s234 + $0x4] sm:$0xf] %vm435, %v1847
      %1858 = vst.msk [vmem:[%s234 + $0x8] sm:$0xf] %vm435, %v1849
      %1859 = vst.msk [vmem:[%s234 + $0xc] sm:$0xf] %vm435, %v1851
      %1860 = vst.msk [vmem:[%s234 + $0x10] sm:$0xf] %vm435, %v1853
      %1861 = vst.msk [vmem:[%s234 + $0x14] sm:$0xf] %vm435, %v1855
      %p1862 = scmp.lt.s32.totalorder %s15, 1
      %s1863 = scalar_select %p1862, %s15, 1
      %s1864 = smul.addr %s1863, 6
      %s1865 = smul.addr %s1864, 4
      %s1866 = scalar_lea.vmem %s4, %s1865
      // Predicated region
      $region37: #{tpu_custom_call.1} parent=35 // pred_check
        %p1867 = pneg %p132
      $region38: #{tpu_custom_call.1} parent=35 // pred_check_branch
        %1869 = sbr.rel (%p1867) target = $region40
      $region39: #{tpu_custom_call.1} parent=35 // pred_region
        _
      $region40: #{tpu_custom_call.1} parent=35 // pred_fallthru
        _
    $region36: #{tpu_custom_call.1} parent=5 // pred_fallthru
      _
    %p1870 = scmp.le.s32.totalorder 2, %s10
    // Predicated region
    $region41: #{tpu_custom_call.1} parent=5 // pred_check
      %p1871 = pneg %p1870
    $region42: #{tpu_custom_call.1} parent=5 // pred_check_branch
      %1873 = sbr.rel (%p1871) target = $region44
    $region43: #{tpu_custom_call.1} parent=5 // pred_region
      %s1874 = ssub.s32 %s10, 2
      // Predicated region
      $region45: #{tpu_custom_call.1} parent=43 // pred_check
        %p1875 = pneg %p138
      $region46: #{tpu_custom_call.1} parent=43 // pred_check_branch
        %1877 = sbr.rel (%p1875) target = $region48
      $region47: #{tpu_custom_call.1} parent=43 // pred_region
        %p1878 = scmp.lt.s32.totalorder %s16, 1
        %s1879 = scalar_select %p1878, %s16, 1
        %s1880 = smul.addr %s1879, 6
        %s1881 = smul.addr %s1880, 4
        %s1882 = scalar_lea.vmem %s4, %s1881
      $region48: #{tpu_custom_call.1} parent=43 // pred_fallthru
        _
    $region44: #{tpu_custom_call.1} parent=5 // pred_fallthru
      _
  $region6: #{tpu_custom_call.1} parent=0 // loop_footer
    %s14 = sadd.s32 1, %s10
  $region7: #{tpu_custom_call.1} parent=0 // loop_footer_branch
    %9 = sbr.rel target = $region3
  $region8: #{tpu_custom_call.1} parent=0 // loop_exit
    _

</llo_original>
